<compile_context>
chip_gen: v7x
topology: tpu7x:2x2x1
jax: 0.10.0
libtpu: 0.0.40
codegen_flags: <defaults>
</compile_context>

<pallas_src>
import functools
from typing import NamedTuple

import jax
import jax.numpy as jnp
from jax import lax
from jax.experimental import pallas as pl
from jax.experimental.pallas import tpu as pltpu


def _round_up(x, m):
    return (x + m - 1) // m * m


def _cdiv(a, b):
    return (a + b - 1) // b


def _largest_divisor_leq(n, cap):
    for d in range(min(n, cap), 0, -1):
        if n % d == 0:
            return d
    return 1


def _vmem_cap_bytes():
    # Generation-aware cap: ~48 MiB on v7x (64 MiB physical), ~112 MiB on
    # v5e/v6e (128 MiB physical); always leave headroom for Mosaic scratch.
    cap = 128 << 20
    try:
        info = pltpu.get_tpu_info()
        cap = int(getattr(info, "vmem_capacity_bytes", cap))
    except Exception:
        pass
    return max(cap - (16 << 20), 32 << 20)


# ---------------------------------------------------------------------------
# Memory-bank preprocessing (hoisted out of the per-call path).
# ---------------------------------------------------------------------------
class BankArrays(NamedTuple):
    mb_f32: jax.Array     # (M, D)  original values (for gathers / support feats)
    mb_bf: jax.Array      # (Mp, Dp) bf16, zero padded (MXU input)
    mb_sq_col: jax.Array  # (Mp, 1) f32, +inf padded rows (1-NN partial distance)
    mb_sq_row: jax.Array  # (1, Mp) f32, +inf padded cols (cdist kernel)


class BankConfig(NamedTuple):
    M: int
    Mp: int
    D: int
    Dp: int
    tile_m: int


def prepare_memory_bank(memory_bank, tile_m=None):
    """One-time preprocessing of the (constant at inference) memory bank."""
    M, D = memory_bank.shape
    Dp = _round_up(D, 128)
    if tile_m is None:
        # bigger tiles where VMEM allows: 2048 on v5e/v6e, 1024 on v7x
        tile_m = 2048 if _vmem_cap_bytes() >= (96 << 20) else 1024
    tile_m = min(tile_m, _round_up(M, 128))
    Mp = _round_up(M, tile_m)

    mb_f32 = memory_bank.astype(jnp.float32)
    mb_sq = jnp.sum(mb_f32 * mb_f32, axis=1)                        # (M,)
    # +inf padding: padded rows can never win the (arg)min -> no in-kernel mask.
    # Last bank tile always holds >=1 valid row (Mp - tile_m < M), so the
    # running min stays finite and the argmin never selects a padded row.
    mb_sq_p = jnp.pad(mb_sq, (0, Mp - M), constant_values=jnp.inf)
    mb_bf = jnp.pad(memory_bank, ((0, Mp - M), (0, Dp - D))).astype(jnp.bfloat16)

    arrays = BankArrays(mb_f32=mb_f32, mb_bf=mb_bf,
                        mb_sq_col=mb_sq_p.reshape(Mp, 1),
                        mb_sq_row=mb_sq_p.reshape(1, Mp))
    cfg = BankConfig(M=M, Mp=Mp, D=D, Dp=Dp, tile_m=tile_m)
    return arrays, cfg


# ---------------------------------------------------------------------------
# Pallas kernel 1: AvgPool2d(kernel_size=3, stride=1, padding=1), NHWC layout.
# (torch default count_include_pad=True -> always divide by 9)
# C on the lane axis, W on sublanes; separable 3-tap passes; zero borders
# handled in-kernel (no HBM pad copy).
# ---------------------------------------------------------------------------
def _avgpool3_nhwc_kernel(x_ref, o_ref):
    x = x_ref[0].astype(jnp.float32)                       # (H, W, tc)
    H, W, tc = x.shape
    # vertical 3-tap along H (leading axis -> no lane/sublane shuffles)
    zh = jnp.zeros((1, W, tc), jnp.float32)
    v = (x
         + jnp.concatenate([x[1:], zh], axis=0)
         + jnp.concatenate([zh, x[:-1]], axis=0))
    # horizontal 3-tap along W (sublane axis)
    zw = jnp.zeros((H, 1, tc), jnp.float32)
    s = (v
         + jnp.concatenate([v[:, 1:], zw], axis=1)
         + jnp.concatenate([zw, v[:, :-1]], axis=1))
    o_ref[0] = (s * (1.0 / 9.0)).astype(o_ref.dtype)


def avgpool3x3_s1_p1(x, tile_c=256):
    """x: (B, H, W, C) NHWC -> (B, H, W, C)."""
    B, H, W, C = x.shape
    if C % 128 == 0:
        tc = 128 * _largest_divisor_leq(C // 128, max(1, tile_c // 128))
    else:
        tc = C      # small / odd channel counts: take the full channel dim
    return pl.pallas_call(
        _avgpool3_nhwc_kernel,
        out_shape=jax.ShapeDtypeStruct((B, H, W, C), x.dtype),
        grid=(B, C // tc),
        in_specs=[pl.BlockSpec((1, H, W, tc), lambda b, c: (b, 0, 0, c))],
        out_specs=pl.BlockSpec((1, H, W, tc), lambda b, c: (b, 0, 0, c)),
        compiler_params=pltpu.CompilerParams(
            dimension_semantics=("parallel", "parallel")),
    )(x)


# ---------------------------------------------------------------------------
# Pallas kernel 2: brute-force 1-NN (euclidean) against the memory bank.
# Grid = (query tiles [parallel], bank tiles [arbitrary]); running min/argmin
# kept in VMEM scratch; bf16 MXU Gram trick; sqrt deferred to finalize.
# Distances are computed transposed (bank rows on sublanes) so reductions and
# outputs are lane-dense (1, tile_n).  Padded bank rows carry +inf in ||m||^2,
# so no per-step masking is needed; argmin uses a tile-local iota only.
# ---------------------------------------------------------------------------
def _nn_min_kernel(xsq_ref, xt_ref, mb_ref, mbsq_ref, score_ref, loc_ref,
                   min_ref, arg_ref, *, tile_m):
    mi = pl.program_id(1)

    @pl.when(mi == 0)
    def _init():
        min_ref[...] = jnp.full(min_ref.shape, jnp.inf, jnp.float32)
        arg_ref[...] = jnp.zeros(arg_ref.shape, jnp.int32)

    # (tile_m, Dp) @ (Dp, tile_n) on the MXU (bf16 in, f32 accumulate); queries
    # were pre-transposed host-side so no implicit transpose happens per step.
    xy = lax.dot_general(mb_ref[...], xt_ref[...],
                         (((1,), (0,)), ((), ())),
                         preferred_element_type=jnp.float32)       # (tile_m, tile_n)
    # partial squared distance: ||m||^2 - 2 m.x  (query norm added at finalize;
    # constant per query so it does not affect the argmin). Padded rows = +inf.
    r = mbsq_ref[...] - 2.0 * xy

    rmin = jnp.min(r, axis=0, keepdims=True)                       # (1, tile_n)
    row = lax.broadcasted_iota(jnp.int32, r.shape, 0)              # tile-local ids
    loc = jnp.min(jnp.where(r <= rmin, row, jnp.int32(2147483647)),
                  axis=0, keepdims=True) + mi * tile_m             # (1, tile_n)

    better = rmin < min_ref[...]          # strict '<' keeps first occurrence
    arg_ref[...] = jnp.where(better, loc, arg_ref[...])
    min_ref[...] = jnp.where(better, rmin, min_ref[...])

    @pl.when(mi == pl.num_programs(1) - 1)
    def _finalize():
        d2 = jnp.maximum(xsq_ref[...] + min_ref[...], 0.0)
        score_ref[...] = jnp.sqrt(d2)     # deferred sqrt: tile_n values only
        loc_ref[...] = arg_ref[...]


def nearest_neighbors_1(embedding, bank: BankArrays, cfg: BankConfig, tile_n=512):
    """embedding: (N, D) -> scores (N,), locations (N,)."""
    N, D = embedding.shape
    assert D == cfg.D
    Dp, tile_m, Mp = cfg.Dp, cfg.tile_m, cfg.Mp

    Np128 = _round_up(N, 128)
    tile_n = min(tile_n, Np128)
    # keep >=2 parallel query tiles when N permits (v7x has 2 TensorCores)
    if Np128 >= 256 and Np128 // tile_n < 2:
        tile_n = _round_up(_cdiv(Np128, 2), 128)

    vmem_cap = _vmem_cap_bytes()

    def _est(tn):
        return (2 * (Dp * tn * 2) + 2 * (tile_m * Dp * 2)   # bf16 blocks x2 buffers
                + 2 * (tile_m * 4) + 2 * (tn * 4)           # norm blocks
                + 4 * (tn * 4) + 2 * (tn * 4)               # outputs + scratch
                + 3 * tile_m * tn * 4)                      # xy / r / iota temps

    while tile_n > 128 and _est(tile_n) + (8 << 20) > vmem_cap:
        tile_n = max(128, tile_n // 2)

    Np = _round_up(N, tile_n)
    n_tiles, m_tiles = Np // tile_n, Mp // tile_m

    emb_f32 = embedding.astype(jnp.float32)
    x_sq = jnp.pad(jnp.sum(emb_f32 * emb_f32, axis=1), (0, Np - N)).reshape(1, Np)
    # queries pre-transposed host-side (one-time pass) -> (Dp, Np)
    emb_t = jnp.pad(embedding.astype(jnp.bfloat16),
                    ((0, Np - N), (0, Dp - D))).T

    kernel = functools.partial(_nn_min_kernel, tile_m=tile_m)
    vmem = int(min(max(_est(tile_n) + (8 << 20), 32 << 20), vmem_cap))

    scores, locs = pl.pallas_call(
        kernel,
        out_shape=(jax.ShapeDtypeStruct((1, Np), jnp.float32),
                   jax.ShapeDtypeStruct((1, Np), jnp.int32)),
        grid=(n_tiles, m_tiles),
        in_specs=[pl.BlockSpec((1, tile_n), lambda i, j: (0, i)),      # ||x||^2
                  pl.BlockSpec((Dp, tile_n), lambda i, j: (0, i)),     # queries^T
                  pl.BlockSpec((tile_m, Dp), lambda i, j: (j, 0)),     # bank tile
                  pl.BlockSpec((tile_m, 1), lambda i, j: (j, 0))],     # ||m||^2
        out_specs=(pl.BlockSpec((1, tile_n), lambda i, j: (0, i)),
                   pl.BlockSpec((1, tile_n), lambda i, j: (0, i))),
        scratch_shapes=[pltpu.VMEM((1, tile_n), jnp.float32),   # running min d^2
                        pltpu.VMEM((1, tile_n), jnp.int32)],    # running argmin
        compiler_params=pltpu.CompilerParams(
            dimension_semantics=("parallel", "arbitrary"),
            vmem_limit_bytes=vmem),
    )(x_sq, emb_t, bank.mb_bf, bank.mb_sq_col)
    return scores.reshape(-1)[:N], locs.reshape(-1)[:N]


# ---------------------------------------------------------------------------
# Pallas kernel 3: pairwise *squared* euclidean distances (small query set),
# tiled over the memory bank; used only for the top-k support-sample indices
# in compute_anomaly_score (sqrt is monotone -> same indices).  Query norms /
# bf16 cast hoisted to the wrapper; bank is the pre-prepped shared one.
# ---------------------------------------------------------------------------
def _cdist_sq_kernel(x_ref, xsq_ref, mb_ref, mbsq_ref, o_ref):
    xy = lax.dot_general(x_ref[...], mb_ref[...],
                         (((1,), (1,)), ((), ())),
                         preferred_element_type=jnp.float32)      # (Bp, tile_m)
    o_ref[...] = jnp.maximum(xsq_ref[...] + mbsq_ref[...] - 2.0 * xy, 0.0)


def pairwise_sq_euclidean(x, bank: BankArrays, cfg: BankConfig):
    """x: (B, D) -> squared distances (B, M) against the prepped bank."""
    B, D = x.shape
    assert D == cfg.D
    Bp = _round_up(B, 8)
    tile_m, Mp, Dp = cfg.tile_m, cfg.Mp, cfg.Dp

    xp = jnp.pad(x.astype(jnp.float32), ((0, Bp - B), (0, Dp - D)))
    x_sq = jnp.sum(xp * xp, axis=1, keepdims=True)                 # (Bp, 1)
    x_bf = xp.astype(jnp.bfloat16)

    vmem_cap = _vmem_cap_bytes()
    est = (2 * Bp * Dp * 2 + 2 * Bp * 4 + 2 * tile_m * Dp * 2
           + 2 * tile_m * 4 + 4 * Bp * tile_m * 4)
    vmem = int(min(max(est + (8 << 20), 32 << 20), vmem_cap))

    d2 = pl.pallas_call(
        _cdist_sq_kernel,
        out_shape=jax.ShapeDtypeStruct((Bp, Mp), jnp.float32),
        grid=(Mp // tile_m,),
        in_specs=[pl.BlockSpec((Bp, Dp), lambda j: (0, 0)),
                  pl.BlockSpec((Bp, 1), lambda j: (0, 0)),
                  pl.BlockSpec((tile_m, Dp), lambda j: (j, 0)),
                  pl.BlockSpec((1, tile_m), lambda j: (0, j))],
        out_specs=pl.BlockSpec((Bp, tile_m), lambda j: (0, j)),
        compiler_params=pltpu.CompilerParams(
            dimension_semantics=("parallel",),
            vmem_limit_bytes=vmem),
    )(x_bf, x_sq, bank.mb_bf, bank.mb_sq_row)
    return d2[:B, :cfg.M]


# ---------------------------------------------------------------------------
# Glue: synthetic NHWC feature extractor, resizing, anomaly score, forward.
# ---------------------------------------------------------------------------
# TODO(synk): CustomFeatureExtractor is an external CNN backbone; a synthetic
# deterministic 2-layer conv stand-in is used here (plain JAX glue, NHWC).
def init_params(key, c_in=3, c1=8, c2=16):
    k1, k2, k3, k4 = jax.random.split(key, 4)
    return {
        "w1": 0.1 * jax.random.normal(k1, (3, 3, c_in, c1), jnp.float32),
        "b1": 0.05 * jax.random.normal(k2, (c1,), jnp.float32),
        "w2": 0.1 * jax.random.normal(k3, (3, 3, c1, c2), jnp.float32),
        "b2": 0.05 * jax.random.normal(k4, (c2,), jnp.float32),
    }


def _conv(x, w, b, stride):
    y = lax.conv_general_dilated(
        x, w, window_strides=(stride, stride), padding=((1, 1), (1, 1)),
        dimension_numbers=("NHWC", "HWIO", "NHWC"))
    return y + b


def feature_extractor(x_nchw, params):
    # external interface stays NCHW (PyTorch convention); one cheap transpose of
    # the 3-channel input, all feature maps stay NHWC from here on.
    x = jnp.transpose(x_nchw, (0, 2, 3, 1))
    f1 = jax.nn.relu(_conv(x, params["w1"], params["b1"], stride=2))   # (B,H/2,W/2, 8)
    f2 = jax.nn.relu(_conv(f1, params["w2"], params["b2"], stride=2))  # (B,H/4,W/4,16)
    return [f1, f2]


def _nearest_resize_nhwc(f, h_out, w_out):
    # matches torch.nn.Upsample(mode='nearest'): src = floor(dst * in / out)
    _, H, W, _ = f.shape
    hi = jnp.arange(h_out) * H // h_out
    wi = jnp.arange(w_out) * W // w_out
    return f[:, hi][:, :, wi]


def compute_anomaly_score(patch_scores, locations, embedding, bank, cfg,
                          num_neighbors):
    B, P = patch_scores.shape
    if num_neighbors == 1:
        return jnp.max(patch_scores, axis=1)
    max_patches = jnp.argmax(patch_scores, axis=1)                      # (B,)
    emb_b = embedding.reshape(B, P, -1)
    max_feats = emb_b[jnp.arange(B), max_patches]                       # (B, D)
    score = patch_scores[jnp.arange(B), max_patches]                    # (B,)
    nn_index = locations[jnp.arange(B), max_patches]                    # (B,)
    nn_sample = bank.mb_f32[nn_index]                                   # (B, D)
    k = min(num_neighbors, cfg.M)
    d2 = pairwise_sq_euclidean(nn_sample, bank, cfg)                    # Pallas, (B, M)
    _, support = lax.top_k(-d2, k)                                      # k smallest dists
    support_feats = bank.mb_f32[support]                                # (B, k, D)
    diff = max_feats[:, None, :] - support_feats
    d = jnp.sqrt(jnp.maximum(jnp.sum(diff * diff, axis=-1), 0.0))       # (B, k)
    weights = (1.0 - jax.nn.softmax(d, axis=1))[:, 0]
    return weights * score


def patchcore_forward(x, params, bank, *, cfg, input_size, num_neighbors=9):
    """Inference-mode PatchCore forward: returns (anomaly_maps, pred_scores)."""
    feats = feature_extractor(x, params)                                # NHWC
    feats = [avgpool3x3_s1_p1(f) for f in feats]                        # Pallas smoothing
    h_max = max(f.shape[1] for f in feats)
    w_max = max(f.shape[2] for f in feats)
    feats = [_nearest_resize_nhwc(f, h_max, w_max) for f in feats]
    embedding_nhwc = jnp.concatenate(feats, axis=-1)                    # (B, H, W, D)
    B, H, W, D = embedding_nhwc.shape
    # NHWC flatten == permute(0,2,3,1).reshape(-1, C): no extra HBM transpose.
    embedding = embedding_nhwc.reshape(-1, D)
    patch_scores_flat, locations_flat = nearest_neighbors_1(embedding, bank, cfg)
    patch_scores = patch_scores_flat.reshape(B, -1)
    locations = locations_flat.reshape(B, -1)
    pred_scores = compute_anomaly_score(patch_scores, locations, embedding,
                                        bank, cfg, num_neighbors)
    patch_scores_map = patch_scores.reshape(B, 1, H, W)
    # TODO(synk): AnomalyMapGenerator source not provided; bilinear upsample to
    # the input size only, Gaussian blur omitted.
    anomaly_maps = jax.image.resize(
        patch_scores_map, (B, 1, input_size[0], input_size[1]), method="bilinear")
    return anomaly_maps, pred_scores


if __name__ == "__main__":
    key = jax.random.PRNGKey(0)
    kx, kp, kmb = jax.random.split(key, 3)

    B, C_in, Himg, Wimg = 2, 3, 32, 32
    x = jax.random.normal(kx, (B, C_in, Himg, Wimg), jnp.float32)
    params = init_params(kp, c_in=C_in, c1=8, c2=16)

    D_embed = 8 + 16          # concatenated channel dim of the two feature maps
    M_bank = 64               # synthetic memory bank size
    memory_bank = jax.random.normal(kmb, (M_bank, D_embed), jnp.float32)

    # Bank preprocessing hoisted out of the per-call path (done once).
    bank_arrays, bank_cfg = prepare_memory_bank(memory_bank)

    fwd = jax.jit(functools.partial(patchcore_forward, cfg=bank_cfg,
                                    input_size=(Himg, Wimg), num_neighbors=9))
    anomaly_maps, pred_scores = fwd(x, params, bank_arrays)
    jax.block_until_ready((anomaly_maps, pred_scores))

    assert anomaly_maps.shape == (B, 1, Himg, Wimg)
    assert pred_scores.shape == (B,)
    assert bool(jnp.all(jnp.isfinite(anomaly_maps)))
    assert bool(jnp.all(jnp.isfinite(pred_scores)))
    print("KERNEL_OK")
</pallas_src>

<mosaic_0001>
module attributes {stable_mosaic.version = 11 : i64} {
  func.func @_avgpool3_nhwc_kernel(%arg0: i32, %arg1: i32, %arg2: memref<1x16x16x8xf32, #tpu.memory_space<vmem>>, %arg3: memref<1x16x16x8xf32, #tpu.memory_space<vmem>>) attributes {dimension_semantics = [#tpu.dimension_semantics<parallel>, #tpu.dimension_semantics<parallel>], iteration_bounds = array<i64: 2, 1>, scalar_prefetch = 0 : i64, scratch_operands = 0 : i64, tpu.core_type = #tpu.core_type<tc>, window_params = [{transform_indices = @transform_0, window_bounds = array<i64: 1, 16, 16, 8>}, {transform_indices = @transform_1, window_bounds = array<i64: 1, 16, 16, 8>}]} {
    %c0 = arith.constant 0 : index
    %c0_0 = arith.constant 0 : index
    %c0_1 = arith.constant 0 : index
    %c0_2 = arith.constant 0 : index
    %0 = vector.load %arg2[%c0, %c0_0, %c0_1, %c0_2] : memref<1x16x16x8xf32, #tpu.memory_space<vmem>>, vector<1x16x16x8xf32>
    %1 = vector.shape_cast %0 : vector<1x16x16x8xf32> to vector<16x16x8xf32>
    %cst = arith.constant 0.000000e+00 : f32
    %2 = vector.broadcast %cst : f32 to vector<1x16x8xf32>
    %3 = vector.extract_strided_slice %1 {offsets = [1, 0, 0], sizes = [15, 16, 8], strides = [1, 1, 1]} : vector<16x16x8xf32> to vector<15x16x8xf32>
    %4 = tpu.concatenate %3, %2 in 0 : vector<15x16x8xf32>, vector<1x16x8xf32> -> vector<16x16x8xf32>
    %5 = arith.addf %1, %4 : vector<16x16x8xf32>
    %6 = vector.extract_strided_slice %1 {offsets = [0, 0, 0], sizes = [15, 16, 8], strides = [1, 1, 1]} : vector<16x16x8xf32> to vector<15x16x8xf32>
    %7 = tpu.concatenate %2, %6 in 0 : vector<1x16x8xf32>, vector<15x16x8xf32> -> vector<16x16x8xf32>
    %8 = arith.addf %5, %7 : vector<16x16x8xf32>
    %cst_3 = arith.constant 0.000000e+00 : f32
    %9 = vector.broadcast %cst_3 : f32 to vector<16x1x8xf32>
    %10 = vector.extract_strided_slice %8 {offsets = [0, 1, 0], sizes = [16, 15, 8], strides = [1, 1, 1]} : vector<16x16x8xf32> to vector<16x15x8xf32>
    %11 = tpu.concatenate %10, %9 in 1 : vector<16x15x8xf32>, vector<16x1x8xf32> -> vector<16x16x8xf32>
    %12 = arith.addf %8, %11 : vector<16x16x8xf32>
    %13 = vector.extract_strided_slice %8 {offsets = [0, 0, 0], sizes = [16, 15, 8], strides = [1, 1, 1]} : vector<16x16x8xf32> to vector<16x15x8xf32>
    %14 = tpu.concatenate %9, %13 in 1 : vector<16x1x8xf32>, vector<16x15x8xf32> -> vector<16x16x8xf32>
    %15 = arith.addf %12, %14 : vector<16x16x8xf32>
    %cst_4 = arith.constant 0.111111112 : f32
    %16 = vector.broadcast %cst_4 : f32 to vector<16x16x8xf32>
    %17 = arith.mulf %15, %16 : vector<16x16x8xf32>
    %c0_5 = arith.constant 0 : index
    %c0_6 = arith.constant 0 : index
    %c0_7 = arith.constant 0 : index
    %c0_8 = arith.constant 0 : index
    %18 = vector.load %arg3[%c0_5, %c0_6, %c0_7, %c0_8] : memref<1x16x16x8xf32, #tpu.memory_space<vmem>>, vector<1x16x16x8xf32>
    %19 = vector.shape_cast %18 : vector<1x16x16x8xf32> to vector<16x16x8xf32>
    %20 = vector.shape_cast %17 : vector<16x16x8xf32> to vector<1x16x16x8xf32>
    tpu.vector_store %arg3[%c0_5, %c0_6, %c0_7, %c0_8], %20 {strides = array<i32>} : memref<1x16x16x8xf32, #tpu.memory_space<vmem>>, vector<1x16x16x8xf32>,
    return
  }
  func.func @transform_0(%arg0: i32, %arg1: i32) -> (i32, i32, i32, i32) {
    %c0_i32 = arith.constant 0 : i32
    %c0_i32_0 = arith.constant 0 : i32
    %c0_i32_1 = arith.constant 0 : i32
    return %arg0, %c0_i32, %c0_i32_0, %arg1 : i32, i32, i32, i32
  }
  func.func @transform_1(%arg0: i32, %arg1: i32) -> (i32, i32, i32, i32) {
    %c0_i32 = arith.constant 0 : i32
    %c0_i32_0 = arith.constant 0 : i32
    %c0_i32_1 = arith.constant 0 : i32
    return %arg0, %c0_i32, %c0_i32_0, %arg1 : i32, i32, i32, i32
  }
}

module attributes {stable_mosaic.version = 11 : i64} {
  func.func @_avgpool3_nhwc_kernel(%arg0: i32, %arg1: i32, %arg2: memref<1x8x8x16xf32, #tpu.memory_space<vmem>>, %arg3: memref<1x8x8x16xf32, #tpu.memory_space<vmem>>) attributes {dimension_semantics = [#tpu.dimension_semantics<parallel>, #tpu.dimension_semantics<parallel>], iteration_bounds = array<i64: 2, 1>, scalar_prefetch = 0 : i64, scratch_operands = 0 : i64, tpu.core_type = #tpu.core_type<tc>, window_params = [{transform_indices = @transform_0, window_bounds = array<i64: 1, 8, 8, 16>}, {transform_indices = @transform_1, window_bounds = array<i64: 1, 8, 8, 16>}]} {
    %c0 = arith.constant 0 : index
    %c0_0 = arith.constant 0 : index
    %c0_1 = arith.constant 0 : index
    %c0_2 = arith.constant 0 : index
    %0 = vector.load %arg2[%c0, %c0_0, %c0_1, %c0_2] : memref<1x8x8x16xf32, #tpu.memory_space<vmem>>, vector<1x8x8x16xf32>
    %1 = vector.shape_cast %0 : vector<1x8x8x16xf32> to vector<8x8x16xf32>
    %cst = arith.constant 0.000000e+00 : f32
    %2 = vector.broadcast %cst : f32 to vector<1x8x16xf32>
    %3 = vector.extract_strided_slice %1 {offsets = [1, 0, 0], sizes = [7, 8, 16], strides = [1, 1, 1]} : vector<8x8x16xf32> to vector<7x8x16xf32>
    %4 = tpu.concatenate %3, %2 in 0 : vector<7x8x16xf32>, vector<1x8x16xf32> -> vector<8x8x16xf32>
    %5 = arith.addf %1, %4 : vector<8x8x16xf32>
    %6 = vector.extract_strided_slice %1 {offsets = [0, 0, 0], sizes = [7, 8, 16], strides = [1, 1, 1]} : vector<8x8x16xf32> to vector<7x8x16xf32>
    %7 = tpu.concatenate %2, %6 in 0 : vector<1x8x16xf32>, vector<7x8x16xf32> -> vector<8x8x16xf32>
    %8 = arith.addf %5, %7 : vector<8x8x16xf32>
    %cst_3 = arith.constant 0.000000e+00 : f32
    %9 = vector.broadcast %cst_3 : f32 to vector<8x1x16xf32>
    %10 = vector.extract_strided_slice %8 {offsets = [0, 1, 0], sizes = [8, 7, 16], strides = [1, 1, 1]} : vector<8x8x16xf32> to vector<8x7x16xf32>
    %11 = tpu.concatenate %10, %9 in 1 : vector<8x7x16xf32>, vector<8x1x16xf32> -> vector<8x8x16xf32>
    %12 = arith.addf %8, %11 : vector<8x8x16xf32>
    %13 = vector.extract_strided_slice %8 {offsets = [0, 0, 0], sizes = [8, 7, 16], strides = [1, 1, 1]} : vector<8x8x16xf32> to vector<8x7x16xf32>
    %14 = tpu.concatenate %9, %13 in 1 : vector<8x1x16xf32>, vector<8x7x16xf32> -> vector<8x8x16xf32>
    %15 = arith.addf %12, %14 : vector<8x8x16xf32>
    %cst_4 = arith.constant 0.111111112 : f32
    %16 = vector.broadcast %cst_4 : f32 to vector<8x8x16xf32>
    %17 = arith.mulf %15, %16 : vector<8x8x16xf32>
    %c0_5 = arith.constant 0 : index
    %c0_6 = arith.constant 0 : index
    %c0_7 = arith.constant 0 : index
    %c0_8 = arith.constant 0 : index
    %18 = vector.load %arg3[%c0_5, %c0_6, %c0_7, %c0_8] : memref<1x8x8x16xf32, #tpu.memory_space<vmem>>, vector<1x8x8x16xf32>
    %19 = vector.shape_cast %18 : vector<1x8x8x16xf32> to vector<8x8x16xf32>
    %20 = vector.shape_cast %17 : vector<8x8x16xf32> to vector<1x8x8x16xf32>
    tpu.vector_store %arg3[%c0_5, %c0_6, %c0_7, %c0_8], %20 {strides = array<i32>} : memref<1x8x8x16xf32, #tpu.memory_space<vmem>>, vector<1x8x8x16xf32>,
    return
  }
  func.func @transform_0(%arg0: i32, %arg1: i32) -> (i32, i32, i32, i32) {
    %c0_i32 = arith.constant 0 : i32
    %c0_i32_0 = arith.constant 0 : i32
    %c0_i32_1 = arith.constant 0 : i32
    return %arg0, %c0_i32, %c0_i32_0, %arg1 : i32, i32, i32, i32
  }
  func.func @transform_1(%arg0: i32, %arg1: i32) -> (i32, i32, i32, i32) {
    %c0_i32 = arith.constant 0 : i32
    %c0_i32_0 = arith.constant 0 : i32
    %c0_i32_1 = arith.constant 0 : i32
    return %arg0, %c0_i32, %c0_i32_0, %arg1 : i32, i32, i32, i32
  }
}

module attributes {stable_mosaic.version = 11 : i64} {
  func.func @_nn_min_kernel(%arg0: i32, %arg1: i32, %arg2: memref<1x256xf32, #tpu.memory_space<vmem>>, %arg3: memref<128x256xbf16, #tpu.memory_space<vmem>>, %arg4: memref<128x128xbf16, #tpu.memory_space<vmem>>, %arg5: memref<128x1xf32, #tpu.memory_space<vmem>>, %arg6: memref<1x256xf32, #tpu.memory_space<vmem>>, %arg7: memref<1x256xi32, #tpu.memory_space<vmem>>, %arg8: memref<1x256xf32, #tpu.memory_space<vmem>>, %arg9: memref<1x256xi32, #tpu.memory_space<vmem>>) attributes {dimension_semantics = [#tpu.dimension_semantics<parallel>, #tpu.dimension_semantics<arbitrary>], iteration_bounds = array<i64: 2, 1>, scalar_prefetch = 0 : i64, scratch_operands = 2 : i64, tpu.core_type = #tpu.core_type<tc>, window_params = [{transform_indices = @transform_0, window_bounds = array<i64: 1, 256>}, {transform_indices = @transform_1, window_bounds = array<i64: 128, 256>}, {transform_indices = @transform_2, window_bounds = array<i64: 128, 128>}, {transform_indices = @transform_3, window_bounds = array<i64: 128, 1>}, {transform_indices = @transform_4, window_bounds = array<i64: 1, 256>}, {transform_indices = @transform_5, window_bounds = array<i64: 1, 256>}]} {
    %c0_i32 = arith.constant 0 : i32
    %0 = arith.cmpi eq, %arg1, %c0_i32 : i32
    %1 = arith.extui %0 : i1 to i32
    %c0_i32_0 = arith.constant 0 : i32
    %2 = arith.cmpi ne, %1, %c0_i32_0 : i32
    scf.if %2 {
      %cst_21 = arith.constant 0x7F800000 : f32
      %34 = vector.broadcast %cst_21 : f32 to vector<1x256xf32>
      %c0_22 = arith.constant 0 : index
      %c0_23 = arith.constant 0 : index
      %35 = vector.load %arg8[%c0_22, %c0_23] : memref<1x256xf32, #tpu.memory_space<vmem>>, vector<1x256xf32>
      tpu.vector_store %arg8[%c0_22, %c0_23], %34 {strides = array<i32>} : memref<1x256xf32, #tpu.memory_space<vmem>>, vector<1x256xf32>,
      %c0_i32_24 = arith.constant 0 : i32
      %36 = vector.broadcast %c0_i32_24 : i32 to vector<1x256xi32>
      %c0_25 = arith.constant 0 : index
      %c0_26 = arith.constant 0 : index
      %37 = vector.load %arg9[%c0_25, %c0_26] : memref<1x256xi32, #tpu.memory_space<vmem>>, vector<1x256xi32>
      tpu.vector_store %arg9[%c0_25, %c0_26], %36 {strides = array<i32>} : memref<1x256xi32, #tpu.memory_space<vmem>>, vector<1x256xi32>,
    } else {
    }
    %c0 = arith.constant 0 : index
    %c0_1 = arith.constant 0 : index
    %3 = vector.load %arg4[%c0, %c0_1] : memref<128x128xbf16, #tpu.memory_space<vmem>>, vector<128x128xbf16>
    %c0_2 = arith.constant 0 : index
    %c0_3 = arith.constant 0 : index
    %4 = vector.load %arg3[%c0_2, %c0_3] : memref<128x256xbf16, #tpu.memory_space<vmem>>, vector<128x256xbf16>
    %cst = arith.constant dense<0.000000e+00> : vector<128x256xf32>
    %5 = tpu.matmul %3, %4, %cst {dimension_numbers = #tpu.dot_dimension_numbers<[1], [0], [0], [1], [0, 0, 1, 1], [], []>} : vector<128x128xbf16>, vector<128x256xbf16>, vector<128x256xf32> -> vector<128x256xf32>
    %c0_4 = arith.constant 0 : index
    %c0_5 = arith.constant 0 : index
    %6 = vector.load %arg5[%c0_4, %c0_5] : memref<128x1xf32, #tpu.memory_space<vmem>>, vector<128x1xf32>
    %cst_6 = arith.constant 2.000000e+00 : f32
    %7 = vector.broadcast %cst_6 : f32 to vector<128x256xf32>
    %8 = arith.mulf %7, %5 : vector<128x256xf32>
    %9 = vector.broadcast %6 : vector<128x1xf32> to vector<128x256xf32>
    %10 = arith.subf %9, %8 : vector<128x256xf32>
    %cst_7 = arith.constant dense<0x7F800000> : vector<256xf32>
    %11 = vector.multi_reduction <minimumf>, %10, %cst_7 [0] : vector<128x256xf32> to vector<256xf32>
    %12 = vector.shape_cast %11 : vector<256xf32> to vector<1x256xf32>
    %13 = tpu.iota {dimensions = array<i32: 0>} : vector<128x256xi32>
    %14 = vector.broadcast %12 : vector<1x256xf32> to vector<128x256xf32>
    %15 = arith.cmpf ole, %10, %14 : vector<128x256xf32>
    %c2147483647_i32 = arith.constant 2147483647 : i32
    %16 = vector.broadcast %c2147483647_i32 : i32 to vector<128x256xi32>
    %17 = arith.select %15, %13, %16 : vector<128x256xi1>, vector<128x256xi32>
    %cst_8 = arith.constant dense<2147483647> : vector<256xi32>
    %18 = vector.multi_reduction <minsi>, %17, %cst_8 [0] : vector<128x256xi32> to vector<256xi32>
    %19 = vector.shape_cast %18 : vector<256xi32> to vector<1x256xi32>
    %c128_i32 = arith.constant 128 : i32
    %20 = arith.muli %arg1, %c128_i32 : i32
    %21 = vector.broadcast %20 : i32 to vector<1x256xi32>
    %22 = arith.addi %19, %21 : vector<1x256xi32>
    %c0_9 = arith.constant 0 : index
    %c0_10 = arith.constant 0 : index
    %23 = vector.load %arg8[%c0_9, %c0_10] : memref<1x256xf32, #tpu.memory_space<vmem>>, vector<1x256xf32>
    %24 = arith.cmpf olt, %12, %23 : vector<1x256xf32>
    %c0_11 = arith.constant 0 : index
    %c0_12 = arith.constant 0 : index
    %25 = vector.load %arg9[%c0_11, %c0_12] : memref<1x256xi32, #tpu.memory_space<vmem>>, vector<1x256xi32>
    %26 = arith.select %24, %22, %25 : vector<1x256xi1>, vector<1x256xi32>
    %c0_13 = arith.constant 0 : index
    %c0_14 = arith.constant 0 : index
    %27 = vector.load %arg9[%c0_13, %c0_14] : memref<1x256xi32, #tpu.memory_space<vmem>>, vector<1x256xi32>
    tpu.vector_store %arg9[%c0_13, %c0_14], %26 {strides = array<i32>} : memref<1x256xi32, #tpu.memory_space<vmem>>, vector<1x256xi32>,
    %c0_15 = arith.constant 0 : index
    %c0_16 = arith.constant 0 : index
    %28 = vector.load %arg8[%c0_15, %c0_16] : memref<1x256xf32, #tpu.memory_space<vmem>>, vector<1x256xf32>
    %29 = arith.select %24, %12, %28 : vector<1x256xi1>, vector<1x256xf32>
    %c0_17 = arith.constant 0 : index
    %c0_18 = arith.constant 0 : index
    %30 = vector.load %arg8[%c0_17, %c0_18] : memref<1x256xf32, #tpu.memory_space<vmem>>, vector<1x256xf32>
    tpu.vector_store %arg8[%c0_17, %c0_18], %29 {strides = array<i32>} : memref<1x256xf32, #tpu.memory_space<vmem>>, vector<1x256xf32>,
    %c0_i32_19 = arith.constant 0 : i32
    %31 = arith.cmpi eq, %arg1, %c0_i32_19 : i32
    %32 = arith.extui %31 : i1 to i32
    %c0_i32_20 = arith.constant 0 : i32
    %33 = arith.cmpi ne, %32, %c0_i32_20 : i32
    scf.if %33 {
      %c0_21 = arith.constant 0 : index
      %c0_22 = arith.constant 0 : index
      %34 = vector.load %arg2[%c0_21, %c0_22] : memref<1x256xf32, #tpu.memory_space<vmem>>, vector<1x256xf32>
      %c0_23 = arith.constant 0 : index
      %c0_24 = arith.constant 0 : index
      %35 = vector.load %arg8[%c0_23, %c0_24] : memref<1x256xf32, #tpu.memory_space<vmem>>, vector<1x256xf32>
      %36 = arith.addf %34, %35 : vector<1x256xf32>
      %cst_25 = arith.constant 0.000000e+00 : f32
      %37 = vector.broadcast %cst_25 : f32 to vector<1x256xf32>
      %38 = arith.maximumf %36, %37 : vector<1x256xf32>
      %39 = math.sqrt %38 : vector<1x256xf32>
      %c0_26 = arith.constant 0 : index
      %c0_27 = arith.constant 0 : index
      %40 = vector.load %arg6[%c0_26, %c0_27] : memref<1x256xf32, #tpu.memory_space<vmem>>, vector<1x256xf32>
      tpu.vector_store %arg6[%c0_26, %c0_27], %39 {strides = array<i32>} : memref<1x256xf32, #tpu.memory_space<vmem>>, vector<1x256xf32>,
      %c0_28 = arith.constant 0 : index
      %c0_29 = arith.constant 0 : index
      %41 = vector.load %arg9[%c0_28, %c0_29] : memref<1x256xi32, #tpu.memory_space<vmem>>, vector<1x256xi32>
      %c0_30 = arith.constant 0 : index
      %c0_31 = arith.constant 0 : index
      %42 = vector.load %arg7[%c0_30, %c0_31] : memref<1x256xi32, #tpu.memory_space<vmem>>, vector<1x256xi32>
      tpu.vector_store %arg7[%c0_30, %c0_31], %41 {strides = array<i32>} : memref<1x256xi32, #tpu.memory_space<vmem>>, vector<1x256xi32>,
    } else {
    }
    return
  }
  func.func @transform_0(%arg0: i32, %arg1: i32) -> (i32, i32) {
    %c0_i32 = arith.constant 0 : i32
    %c0_i32_0 = arith.constant 0 : i32
    return %c0_i32, %arg0 : i32, i32
  }
  func.func @transform_1(%arg0: i32, %arg1: i32) -> (i32, i32) {
    %c0_i32 = arith.constant 0 : i32
    %c0_i32_0 = arith.constant 0 : i32
    return %c0_i32, %arg0 : i32, i32
  }
  func.func @transform_2(%arg0: i32, %arg1: i32) -> (i32, i32) {
    %c0_i32 = arith.constant 0 : i32
    %c0_i32_0 = arith.constant 0 : i32
    return %arg1, %c0_i32 : i32, i32
  }
  func.func @transform_3(%arg0: i32, %arg1: i32) -> (i32, i32) {
    %c0_i32 = arith.constant 0 : i32
    %c0_i32_0 = arith.constant 0 : i32
    return %arg1, %c0_i32 : i32, i32
  }
  func.func @transform_4(%arg0: i32, %arg1: i32) -> (i32, i32) {
    %c0_i32 = arith.constant 0 : i32
    %c0_i32_0 = arith.constant 0 : i32
    return %c0_i32, %arg0 : i32, i32
  }
  func.func @transform_5(%arg0: i32, %arg1: i32) -> (i32, i32) {
    %c0_i32 = arith.constant 0 : i32
    %c0_i32_0 = arith.constant 0 : i32
    return %c0_i32, %arg0 : i32, i32
  }
}

module attributes {stable_mosaic.version = 11 : i64} {
  func.func @_cdist_sq_kernel(%arg0: i32, %arg1: memref<8x128xbf16, #tpu.memory_space<vmem>>, %arg2: memref<8x1xf32, #tpu.memory_space<vmem>>, %arg3: memref<128x128xbf16, #tpu.memory_space<vmem>>, %arg4: memref<1x128xf32, #tpu.memory_space<vmem>>, %arg5: memref<8x128xf32, #tpu.memory_space<vmem>>) attributes {dimension_semantics = [#tpu.dimension_semantics<parallel>], iteration_bounds = array<i64: 1>, scalar_prefetch = 0 : i64, scratch_operands = 0 : i64, tpu.core_type = #tpu.core_type<tc>, window_params = [{pipeline_mode = #tpu.pipeline_mode<synchronous>, transform_indices = @transform_0, window_bounds = array<i64: 8, 128>}, {pipeline_mode = #tpu.pipeline_mode<synchronous>, transform_indices = @transform_1, window_bounds = array<i64: 8, 1>}, {transform_indices = @transform_2, window_bounds = array<i64: 128, 128>}, {transform_indices = @transform_3, window_bounds = array<i64: 1, 128>}, {transform_indices = @transform_4, window_bounds = array<i64: 8, 128>}]} {
    %c0 = arith.constant 0 : index
    %c0_0 = arith.constant 0 : index
    %0 = vector.load %arg1[%c0, %c0_0] : memref<8x128xbf16, #tpu.memory_space<vmem>>, vector<8x128xbf16>
    %c0_1 = arith.constant 0 : index
    %c0_2 = arith.constant 0 : index
    %1 = vector.load %arg3[%c0_1, %c0_2] : memref<128x128xbf16, #tpu.memory_space<vmem>>, vector<128x128xbf16>
    %cst = arith.constant dense<0.000000e+00> : vector<8x128xf32>
    %2 = tpu.matmul %0, %1, %cst {dimension_numbers = #tpu.dot_dimension_numbers<[1], [1], [0], [0], [0, 0, 1, 0], [], []>} : vector<8x128xbf16>, vector<128x128xbf16>, vector<8x128xf32> -> vector<8x128xf32>
    %c0_3 = arith.constant 0 : index
    %c0_4 = arith.constant 0 : index
    %3 = vector.load %arg2[%c0_3, %c0_4] : memref<8x1xf32, #tpu.memory_space<vmem>>, vector<8x1xf32>
    %c0_5 = arith.constant 0 : index
    %c0_6 = arith.constant 0 : index
    %4 = vector.load %arg4[%c0_5, %c0_6] : memref<1x128xf32, #tpu.memory_space<vmem>>, vector<1x128xf32>
    %5 = vector.broadcast %3 : vector<8x1xf32> to vector<8x128xf32>
    %6 = vector.broadcast %4 : vector<1x128xf32> to vector<8x128xf32>
    %7 = arith.addf %5, %6 : vector<8x128xf32>
    %cst_7 = arith.constant 2.000000e+00 : f32
    %8 = vector.broadcast %cst_7 : f32 to vector<8x128xf32>
    %9 = arith.mulf %8, %2 : vector<8x128xf32>
    %10 = arith.subf %7, %9 : vector<8x128xf32>
    %cst_8 = arith.constant 0.000000e+00 : f32
    %11 = vector.broadcast %cst_8 : f32 to vector<8x128xf32>
    %12 = arith.maximumf %10, %11 : vector<8x128xf32>
    %c0_9 = arith.constant 0 : index
    %c0_10 = arith.constant 0 : index
    %13 = vector.load %arg5[%c0_9, %c0_10] : memref<8x128xf32, #tpu.memory_space<vmem>>, vector<8x128xf32>
    tpu.vector_store %arg5[%c0_9, %c0_10], %12 {strides = array<i32>} : memref<8x128xf32, #tpu.memory_space<vmem>>, vector<8x128xf32>,
    return
  }
  func.func @transform_0(%arg0: i32) -> (i32, i32) {
    %c0_i32 = arith.constant 0 : i32
    %c0_i32_0 = arith.constant 0 : i32
    %c0_i32_1 = arith.constant 0 : i32
    return %c0_i32, %c0_i32_0 : i32, i32
  }
  func.func @transform_1(%arg0: i32) -> (i32, i32) {
    %c0_i32 = arith.constant 0 : i32
    %c0_i32_0 = arith.constant 0 : i32
    %c0_i32_1 = arith.constant 0 : i32
    return %c0_i32, %c0_i32_0 : i32, i32
  }
  func.func @transform_2(%arg0: i32) -> (i32, i32) {
    %c0_i32 = arith.constant 0 : i32
    %c0_i32_0 = arith.constant 0 : i32
    return %arg0, %c0_i32 : i32, i32
  }
  func.func @transform_3(%arg0: i32) -> (i32, i32) {
    %c0_i32 = arith.constant 0 : i32
    %c0_i32_0 = arith.constant 0 : i32
    return %c0_i32, %arg0 : i32, i32
  }
  func.func @transform_4(%arg0: i32) -> (i32, i32) {
    %c0_i32 = arith.constant 0 : i32
    %c0_i32_0 = arith.constant 0 : i32
    return %c0_i32, %arg0 : i32, i32
  }
}

</mosaic_0001>

<llo_original>
// kernel: patchcore_forward.4
$region0: #{patchcore_forward.4}
  #allocation0 [shape = 'u32[]', space=smem, size = 0x4, offset = 0x4, fixed_abs, tag = 'smem constant byte address 0x4 - core index']
  #allocation1 [shape = 'u32[144,128]{1,0:T(1,128)}', space=vmem, size = 0x12000, scoped, tag = 'internal scratch']
  %s0 = inlined_call_operand.vmem [shape: f32[2,16,16,8], index: 0, kind: input, shape index: {}]
  %s1 = inlined_call_operand.vmem [shape: f32[2,16,16,8], index: 1, kind: output, shape index: {}]
  %s2 = sld [smem:[#allocation0]]
  $region37: #{patchcore_forward.4} parent=0
    _
  %s4 = ssub.s32 1, %s2
  %s5 = scalar_select 0, %s4, %s2
  loop: start=0, step=1, limit=4
  $region2: #{patchcore_forward.4} parent=0 // loop_pre_header
    _
  $region3: #{patchcore_forward.4} parent=0 // loop_header
    %s7 = sphi 0, %s11
    %p8 = scmp.ge.s32.totalorder %s7, 4
    %s14 = sphi 0, %s26
    %s15 = sphi 0, %s22
    %s16 = sphi 0, %s14
    %s17 = sphi 0, %s15
    %s18 = sphi 0, %s16
    %s19 = sphi 0, %s17
    %s31 = sphi 0, %s33
    %s34 = sphi 0, %s31
    %s35 = sphi 0, %s34
    %s51 = sphi 0, %s35
    %s59 = sphi 0, %s61
    %s62 = sphi 0, %s59
    %s63 = sphi 0, %s62
    %s79 = sphi 0, %s63
  $region4: #{patchcore_forward.4} parent=0 // loop_header_branch
    %10 = sbr.rel (%p8) target = $region8
  $region5: #{patchcore_forward.4} parent=0 // loop_body
    %s12 = ssub.s32 %s7, 1
    %s13 = ssub.s32 %s7, 2
    %s20 = sadd.s32 1, %s15
    %p21 = scmp.ge.s32.totalorder %s20, 1
    %s22 = scalar_select %p21, 0, %s20
    %s23 = sadd.s32 1, %s14
    %s24 = scalar_select %p21, %s23, %s14
    %p25 = scmp.ge.s32.totalorder %s24, 2
    %s26 = scalar_select %p25, 0, %s24
    %s27 = ssub.s32 %s14, %s26
    %s28 = ssub.s32 %s15, %s22
    %s29 = sor.u32 %s27, %s28
    %p30 = scmp.eq.s32.totalorder %s29, 0
    %s32 = sadd.s32 %s31, 1
    %s33 = scalar_select %p30, %s31, %s32
    %p36 = pneg %p30
    %p37 = scmp.eq.s32.totalorder %s7, 1
    %p38 = por %p36, %p37
    %p39 = scmp.ne.s32.totalorder %s31, %s34
    %p40 = scmp.eq.s32.totalorder %s7, 0
    %p41 = por %p39, %p40
    %p42 = scmp.ne.s32.totalorder %s31, %s34
    %p43 = scmp.eq.s32.totalorder %s12, 1
    %p44 = por %p42, %p43
    %p45 = scmp.ne.s32.totalorder %s34, %s35
    %p46 = scmp.eq.s32.totalorder %s12, 0
    %p47 = por %p45, %p46
    %p48 = scmp.ne.s32.totalorder %s34, %s35
    %p49 = scmp.eq.s32.totalorder %s13, 1
    %p50 = por %p48, %p49
    %p52 = scmp.ne.s32.totalorder %s35, %s51
    %p53 = scmp.eq.s32.totalorder %s13, 0
    %p54 = por %p52, %p53
    %s55 = ssub.s32 %s14, %s26
    %s56 = ssub.s32 %s15, %s22
    %s57 = sor.u32 %s55, %s56
    %p58 = scmp.eq.s32.totalorder %s57, 0
    %s60 = sadd.s32 %s59, 1
    %s61 = scalar_select %p58, %s59, %s60
    %p64 = pneg %p58
    %p65 = scmp.eq.s32.totalorder %s7, 1
    %p66 = por %p64, %p65
    %p67 = scmp.ne.s32.totalorder %s59, %s62
    %p68 = scmp.eq.s32.totalorder %s7, 0
    %p69 = por %p67, %p68
    %p70 = scmp.ne.s32.totalorder %s59, %s62
    %p71 = scmp.eq.s32.totalorder %s12, 1
    %p72 = por %p70, %p71
    %p73 = scmp.ne.s32.totalorder %s62, %s63
    %p74 = scmp.eq.s32.totalorder %s12, 0
    %p75 = por %p73, %p74
    %p76 = scmp.ne.s32.totalorder %s62, %s63
    %p77 = scmp.eq.s32.totalorder %s13, 1
    %p78 = por %p76, %p77
    %p80 = scmp.ne.s32.totalorder %s63, %s79
    %p81 = scmp.eq.s32.totalorder %s13, 0
    %p82 = por %p80, %p81
    %p83 = scmp.le.s32.totalorder 1, %s7
    %p84 = scmp.lt.s32.totalorder %s7, 3
    %p85 = pnand %p83, %p84
    %p86 = pneg %p85
    // Predicated region
    $region9: #{patchcore_forward.4} parent=5 // pred_check
      _
    $region10: #{patchcore_forward.4} parent=5 // pred_check_branch
      %88 = sbr.rel (%p85) target = $region12
    $region11: #{patchcore_forward.4} parent=5 // pred_region
      %s89 = ssub.s32 %s7, 1
    $region12: #{patchcore_forward.4} parent=5 // pred_fallthru
      _
    %p90 = scmp.lt.s32.totalorder %s7, 2
    // Predicated region
    $region13: #{patchcore_forward.4} parent=5 // pred_check
      %p91 = pneg %p90
    $region14: #{patchcore_forward.4} parent=5 // pred_check_branch
      %93 = sbr.rel (%p91) target = $region16
    $region15: #{patchcore_forward.4} parent=5 // pred_region
      // Predicated region
      $region17: #{patchcore_forward.4} parent=15 // pred_check
        %p94 = pneg %p41
      $region18: #{patchcore_forward.4} parent=15 // pred_check_branch
        %96 = sbr.rel (%p94) target = $region20
      $region19: #{patchcore_forward.4} parent=15 // pred_region
        %p97 = scmp.lt.s32.totalorder %s14, 1
        %s98 = scalar_select %p97, %s14, 1
        %p99 = scmp.lt.s32.totalorder %s15, 0
        %s100 = scalar_select %p99, %s15, 0
        %s101 = smul.addr %s98, 32
        %s102 = sadd.s32 %s100, %s101
        %s103 = smul.addr %s102, 8
        %s104 = scalar_lea.vmem %s0, %s103
      $region20: #{patchcore_forward.4} parent=15 // pred_fallthru
        _
    $region16: #{patchcore_forward.4} parent=5 // pred_fallthru
      _
    %p105 = scmp.le.s32.totalorder 1, %s7
    %p106 = scmp.lt.s32.totalorder %s7, 3
    %p107 = pnand %p105, %p106
    %p108 = pneg %p107
    // Predicated region
    $region21: #{patchcore_forward.4} parent=5 // pred_check
      _
    $region22: #{patchcore_forward.4} parent=5 // pred_check_branch
      %110 = sbr.rel (%p107) target = $region24
    $region23: #{patchcore_forward.4} parent=5 // pred_region
      %s111 = ssub.s32 %s7, 1
      %p112 = scmp.lt.s32.totalorder %s16, 1
      %s113 = scalar_select %p112, %s16, 1
      %p114 = scmp.lt.s32.totalorder %s17, 0
      %s115 = scalar_select %p114, %s17, 0
      %s116 = smul.addr %s113, 32
      %s117 = sadd.s32 %s115, %s116
      %s118 = smul.addr %s117, 8
      %s119 = scalar_lea.vmem %s0, %s118
      %p120 = pneg %p47
      %p121 = pneg %p44
      %p122 = pneg %p75
      %p123 = pneg %p72
      %p124 = scmp.lt.s32.totalorder %s16, 1
      %s125 = scalar_select %p124, %s16, 1
      %p126 = scmp.lt.s32.totalorder %s17, 0
      %s127 = scalar_select %p126, %s17, 0
      %s128 = smul.addr %s125, 32
      %s129 = sadd.s32 %s127, %s128
      %s130 = smul.addr %s129, 8
      %s131 = scalar_lea.vmem %s1, %s130
      %p132 = scmp.lt.s32.totalorder %s16, 1
      %s133 = scalar_select %p132, %s16, 1
      %p134 = scmp.lt.s32.totalorder %s17, 0
      %s135 = scalar_select %p134, %s17, 0
      %s136 = smul.addr %s133, 32
      %s137 = sadd.s32 %s135, %s136
      %s138 = smul.addr %s137, 8
      %s139 = scalar_lea.vmem %s0, %s138
      %p140 = scmp.lt.s32.totalorder %s16, 1
      %s141 = scalar_select %p140, %s16, 1
      %p142 = scmp.lt.s32.totalorder %s17, 0
      %s143 = scalar_select %p142, %s17, 0
      %s144 = smul.addr %s141, 32
      %s145 = sadd.s32 %s143, %s144
      %s146 = smul.addr %s145, 8
      %s147 = scalar_lea.vmem %s1, %s146
      %v148 = vld [vmem:[%s139] sm:$0xff]
      %v149 = vld [vmem:[%s139 + $0x8] sm:$0xff]
      %v150 = vld [vmem:[%s139 + $0x10] sm:$0xff]
      %v151 = vld [vmem:[%s139 + $0x18] sm:$0xff]
      %v152 = vld [vmem:[%s139 + $0x20] sm:$0xff]
      %v153 = vld [vmem:[%s139 + $0x28] sm:$0xff]
      %v154 = vld [vmem:[%s139 + $0x30] sm:$0xff]
      %v155 = vld [vmem:[%s139 + $0x38] sm:$0xff]
      %v156 = vld [vmem:[%s139 + $0x40] sm:$0xff]
      %v157 = vld [vmem:[%s139 + $0x48] sm:$0xff]
      %v158 = vld [vmem:[%s139 + $0x50] sm:$0xff]
      %v159 = vld [vmem:[%s139 + $0x58] sm:$0xff]
      %v160 = vld [vmem:[%s139 + $0x60] sm:$0xff]
      %v161 = vld [vmem:[%s139 + $0x68] sm:$0xff]
      %v162 = vld [vmem:[%s139 + $0x70] sm:$0xff]
      %v163 = vld [vmem:[%s139 + $0x78] sm:$0xff]
      %v164 = vld [vmem:[%s139 + $0x80] sm:$0xff]
      %v165 = vld [vmem:[%s139 + $0x88] sm:$0xff]
      %v166 = vld [vmem:[%s139 + $0x90] sm:$0xff]
      %v167 = vld [vmem:[%s139 + $0x98] sm:$0xff]
      %v168 = vld [vmem:[%s139 + $0xa0] sm:$0xff]
      %v169 = vld [vmem:[%s139 + $0xa8] sm:$0xff]
      %v170 = vld [vmem:[%s139 + $0xb0] sm:$0xff]
      %v171 = vld [vmem:[%s139 + $0xb8] sm:$0xff]
      %v172 = vld [vmem:[%s139 + $0xc0] sm:$0xff]
      %v173 = vld [vmem:[%s139 + $0xc8] sm:$0xff]
      %v174 = vld [vmem:[%s139 + $0xd0] sm:$0xff]
      %v175 = vld [vmem:[%s139 + $0xd8] sm:$0xff]
      %v176 = vld [vmem:[%s139 + $0xe0] sm:$0xff]
      %v177 = vld [vmem:[%s139 + $0xe8] sm:$0xff]
      %v178 = vld [vmem:[%s139 + $0xf0] sm:$0xff]
      %v179 = vld [vmem:[%s139 + $0xf8] sm:$0xff]
      %v180 = vadd.f32 %v148, %v150
      %v181 = vadd.f32 %v149, %v151
      %v182 = vadd.f32 %v150, %v152
      %v183 = vadd.f32 %v151, %v153
      %v184 = vadd.f32 %v152, %v154
      %v185 = vadd.f32 %v153, %v155
      %v186 = vadd.f32 %v154, %v156
      %v187 = vadd.f32 %v155, %v157
      %v188 = vadd.f32 %v156, %v158
      %v189 = vadd.f32 %v157, %v159
      %v190 = vadd.f32 %v158, %v160
      %v191 = vadd.f32 %v159, %v161
      %v192 = vadd.f32 %v160, %v162
      %v193 = vadd.f32 %v161, %v163
      %v194 = vadd.f32 %v162, %v164
      %v195 = vadd.f32 %v163, %v165
      %v196 = vadd.f32 %v164, %v166
      %v197 = vadd.f32 %v165, %v167
      %v198 = vadd.f32 %v166, %v168
      %v199 = vadd.f32 %v167, %v169
      %v200 = vadd.f32 %v168, %v170
      %v201 = vadd.f32 %v169, %v171
      %v202 = vadd.f32 %v170, %v172
      %v203 = vadd.f32 %v171, %v173
      %v204 = vadd.f32 %v172, %v174
      %v205 = vadd.f32 %v173, %v175
      %v206 = vadd.f32 %v174, %v176
      %v207 = vadd.f32 %v175, %v177
      %v208 = vadd.f32 %v176, %v178
      %v209 = vadd.f32 %v177, %v179
      %v210 = vadd.f32 %v178, 0.0
      %v211 = vadd.f32 %v179, 0.0
      %v212 = vadd.f32 %v180, 0.0
      %v213 = vadd.f32 %v181, 0.0
      %v214 = vadd.f32 %v182, %v148
      %v215 = vadd.f32 %v183, %v149
      %v216 = vadd.f32 %v184, %v150
      %v217 = vadd.f32 %v185, %v151
      %v218 = vadd.f32 %v186, %v152
      %v219 = vadd.f32 %v187, %v153
      %v220 = vadd.f32 %v188, %v154
      %v221 = vadd.f32 %v189, %v155
      %v222 = vadd.f32 %v190, %v156
      %v223 = vadd.f32 %v191, %v157
      %v224 = vadd.f32 %v192, %v158
      %v225 = vadd.f32 %v193, %v159
      %v226 = vadd.f32 %v194, %v160
      %v227 = vadd.f32 %v195, %v161
      %v228 = vadd.f32 %v196, %v162
      %v229 = vadd.f32 %v197, %v163
      %v230 = vadd.f32 %v198, %v164
      %v231 = vadd.f32 %v199, %v165
      %v232 = vadd.f32 %v200, %v166
      %v233 = vadd.f32 %v201, %v167
      %v234 = vadd.f32 %v202, %v168
      %v235 = vadd.f32 %v203, %v169
      %v236 = vadd.f32 %v204, %v170
      %v237 = vadd.f32 %v205, %v171
      %v238 = vadd.f32 %v206, %v172
      %v239 = vadd.f32 %v207, %v173
      %v240 = vadd.f32 %v208, %v174
      %v241 = vadd.f32 %v209, %v175
      %v242 = vadd.f32 %v210, %v176
      %v243 = vadd.f32 %v211, %v177
      %vm276 = vcmask 1046528
      %v277 = vrot.slane %v212, 1
      %v278 = vrot.slane %v213, 1
      %v279 = vsel %vm276, %v277, %v278
      %v280 = vrot.slane %v214, 1
      %v281 = vrot.slane %v215, 1
      %v282 = vsel %vm276, %v280, %v281
      %v283 = vrot.slane %v216, 1
      %v284 = vrot.slane %v217, 1
      %v285 = vsel %vm276, %v283, %v284
      %v286 = vrot.slane %v218, 1
      %v287 = vrot.slane %v219, 1
      %v288 = vsel %vm276, %v286, %v287
      %v289 = vrot.slane %v220, 1
      %v290 = vrot.slane %v221, 1
      %v291 = vsel %vm276, %v289, %v290
      %v292 = vrot.slane %v222, 1
      %v293 = vrot.slane %v223, 1
      %v294 = vsel %vm276, %v292, %v293
      %v295 = vrot.slane %v224, 1
      %v296 = vrot.slane %v225, 1
      %v297 = vsel %vm276, %v295, %v296
      %v298 = vrot.slane %v226, 1
      %v299 = vrot.slane %v227, 1
      %v300 = vsel %vm276, %v298, %v299
      %v301 = vrot.slane %v228, 1
      %v302 = vrot.slane %v229, 1
      %v303 = vsel %vm276, %v301, %v302
      %v304 = vrot.slane %v230, 1
      %v305 = vrot.slane %v231, 1
      %v306 = vsel %vm276, %v304, %v305
      %v307 = vrot.slane %v232, 1
      %v308 = vrot.slane %v233, 1
      %v309 = vsel %vm276, %v307, %v308
      %v310 = vrot.slane %v234, 1
      %v311 = vrot.slane %v235, 1
      %v312 = vsel %vm276, %v310, %v311
      %v313 = vrot.slane %v236, 1
      %v314 = vrot.slane %v237, 1
      %v315 = vsel %vm276, %v313, %v314
      %v316 = vrot.slane %v238, 1
      %v317 = vrot.slane %v239, 1
      %v318 = vsel %vm276, %v316, %v317
      %v319 = vrot.slane %v240, 1
      %v320 = vrot.slane %v241, 1
      %v321 = vsel %vm276, %v319, %v320
      %v322 = vrot.slane %v242, 1
      %v323 = vrot.slane %v243, 1
      %v324 = vsel %vm276, %v322, %v323
      %v357 = vsel %vm276, %v278, 0.0
      %v358 = vsel %vm276, %v281, 0.0
      %v359 = vsel %vm276, %v284, 0.0
      %v360 = vsel %vm276, %v287, 0.0
      %v361 = vsel %vm276, %v290, 0.0
      %v362 = vsel %vm276, %v293, 0.0
      %v363 = vsel %vm276, %v296, 0.0
      %v364 = vsel %vm276, %v299, 0.0
      %v365 = vsel %vm276, %v302, 0.0
      %v366 = vsel %vm276, %v305, 0.0
      %v367 = vsel %vm276, %v308, 0.0
      %v368 = vsel %vm276, %v311, 0.0
      %v369 = vsel %vm276, %v314, 0.0
      %v370 = vsel %vm276, %v317, 0.0
      %v371 = vsel %vm276, %v320, 0.0
      %v372 = vsel %vm276, %v323, 0.0
      %v373 = vadd.f32 %v212, %v279
      %v374 = vadd.f32 %v213, %v357
      %v375 = vadd.f32 %v214, %v282
      %v376 = vadd.f32 %v215, %v358
      %v377 = vadd.f32 %v216, %v285
      %v378 = vadd.f32 %v217, %v359
      %v379 = vadd.f32 %v218, %v288
      %v380 = vadd.f32 %v219, %v360
      %v381 = vadd.f32 %v220, %v291
      %v382 = vadd.f32 %v221, %v361
      %v383 = vadd.f32 %v222, %v294
      %v384 = vadd.f32 %v223, %v362
      %v385 = vadd.f32 %v224, %v297
      %v386 = vadd.f32 %v225, %v363
      %v387 = vadd.f32 %v226, %v300
      %v388 = vadd.f32 %v227, %v364
      %v389 = vadd.f32 %v228, %v303
      %v390 = vadd.f32 %v229, %v365
      %v391 = vadd.f32 %v230, %v306
      %v392 = vadd.f32 %v231, %v366
      %v393 = vadd.f32 %v232, %v309
      %v394 = vadd.f32 %v233, %v367
      %v395 = vadd.f32 %v234, %v312
      %v396 = vadd.f32 %v235, %v368
      %v397 = vadd.f32 %v236, %v315
      %v398 = vadd.f32 %v237, %v369
      %v399 = vadd.f32 %v238, %v318
      %v400 = vadd.f32 %v239, %v370
      %v401 = vadd.f32 %v240, %v321
      %v402 = vadd.f32 %v241, %v371
      %v403 = vadd.f32 %v242, %v324
      %v404 = vadd.f32 %v243, %v372
      %vm405 = vcmask 1040384
      %v406 = vrot.slane %v212, 7
      %v407 = vrot.slane %v213, 7
      %v408 = vsel %vm405, %v406, %v407
      %v409 = vrot.slane %v214, 7
      %v410 = vrot.slane %v215, 7
      %v411 = vsel %vm405, %v409, %v410
      %v412 = vrot.slane %v216, 7
      %v413 = vrot.slane %v217, 7
      %v414 = vsel %vm405, %v412, %v413
      %v415 = vrot.slane %v218, 7
      %v416 = vrot.slane %v219, 7
      %v417 = vsel %vm405, %v415, %v416
      %v418 = vrot.slane %v220, 7
      %v419 = vrot.slane %v221, 7
      %v420 = vsel %vm405, %v418, %v419
      %v421 = vrot.slane %v222, 7
      %v422 = vrot.slane %v223, 7
      %v423 = vsel %vm405, %v421, %v422
      %v424 = vrot.slane %v224, 7
      %v425 = vrot.slane %v225, 7
      %v426 = vsel %vm405, %v424, %v425
      %v427 = vrot.slane %v226, 7
      %v428 = vrot.slane %v227, 7
      %v429 = vsel %vm405, %v427, %v428
      %v430 = vrot.slane %v228, 7
      %v431 = vrot.slane %v229, 7
      %v432 = vsel %vm405, %v430, %v431
      %v433 = vrot.slane %v230, 7
      %v434 = vrot.slane %v231, 7
      %v435 = vsel %vm405, %v433, %v434
      %v436 = vrot.slane %v232, 7
      %v437 = vrot.slane %v233, 7
      %v438 = vsel %vm405, %v436, %v437
      %v439 = vrot.slane %v234, 7
      %v440 = vrot.slane %v235, 7
      %v441 = vsel %vm405, %v439, %v440
      %v442 = vrot.slane %v236, 7
      %v443 = vrot.slane %v237, 7
      %v444 = vsel %vm405, %v442, %v443
      %v445 = vrot.slane %v238, 7
      %v446 = vrot.slane %v239, 7
      %v447 = vsel %vm405, %v445, %v446
      %v448 = vrot.slane %v240, 7
      %v449 = vrot.slane %v241, 7
      %v450 = vsel %vm405, %v448, %v449
      %v451 = vrot.slane %v242, 7
      %v452 = vrot.slane %v243, 7
      %v453 = vsel %vm405, %v451, %v452
      %v486 = vsel %vm405, 0.0, %v406
      %v487 = vsel %vm405, 0.0, %v409
      %v488 = vsel %vm405, 0.0, %v412
      %v489 = vsel %vm405, 0.0, %v415
      %v490 = vsel %vm405, 0.0, %v418
      %v491 = vsel %vm405, 0.0, %v421
      %v492 = vsel %vm405, 0.0, %v424
      %v493 = vsel %vm405, 0.0, %v427
      %v494 = vsel %vm405, 0.0, %v430
      %v495 = vsel %vm405, 0.0, %v433
      %v496 = vsel %vm405, 0.0, %v436
      %v497 = vsel %vm405, 0.0, %v439
      %v498 = vsel %vm405, 0.0, %v442
      %v499 = vsel %vm405, 0.0, %v445
      %v500 = vsel %vm405, 0.0, %v448
      %v501 = vsel %vm405, 0.0, %v451
      %v502 = vadd.f32 %v373, %v486
      %v503 = vadd.f32 %v374, %v408
      %v504 = vadd.f32 %v375, %v487
      %v505 = vadd.f32 %v376, %v411
      %v506 = vadd.f32 %v377, %v488
      %v507 = vadd.f32 %v378, %v414
      %v508 = vadd.f32 %v379, %v489
      %v509 = vadd.f32 %v380, %v417
      %v510 = vadd.f32 %v381, %v490
      %v511 = vadd.f32 %v382, %v420
      %v512 = vadd.f32 %v383, %v491
      %v513 = vadd.f32 %v384, %v423
      %v514 = vadd.f32 %v385, %v492
      %v515 = vadd.f32 %v386, %v426
      %v516 = vadd.f32 %v387, %v493
      %v517 = vadd.f32 %v388, %v429
      %v518 = vadd.f32 %v389, %v494
      %v519 = vadd.f32 %v390, %v432
      %v520 = vadd.f32 %v391, %v495
      %v521 = vadd.f32 %v392, %v435
      %v522 = vadd.f32 %v393, %v496
      %v523 = vadd.f32 %v394, %v438
      %v524 = vadd.f32 %v395, %v497
      %v525 = vadd.f32 %v396, %v441
      %v526 = vadd.f32 %v397, %v498
      %v527 = vadd.f32 %v398, %v444
      %v528 = vadd.f32 %v399, %v499
      %v529 = vadd.f32 %v400, %v447
      %v530 = vadd.f32 %v401, %v500
      %v531 = vadd.f32 %v402, %v450
      %v532 = vadd.f32 %v403, %v501
      %v533 = vadd.f32 %v404, %v453
      %v534 = vmul.f32 %v502, 0.11111111
      %v535 = vmul.f32 %v503, 0.11111111
      %v536 = vmul.f32 %v504, 0.11111111
      %v537 = vmul.f32 %v505, 0.11111111
      %v538 = vmul.f32 %v506, 0.11111111
      %v539 = vmul.f32 %v507, 0.11111111
      %v540 = vmul.f32 %v508, 0.11111111
      %v541 = vmul.f32 %v509, 0.11111111
      %v542 = vmul.f32 %v510, 0.11111111
      %v543 = vmul.f32 %v511, 0.11111111
      %v544 = vmul.f32 %v512, 0.11111111
      %v545 = vmul.f32 %v513, 0.11111111
      %v546 = vmul.f32 %v514, 0.11111111
      %v547 = vmul.f32 %v515, 0.11111111
      %v548 = vmul.f32 %v516, 0.11111111
      %v549 = vmul.f32 %v517, 0.11111111
      %v550 = vmul.f32 %v518, 0.11111111
      %v551 = vmul.f32 %v519, 0.11111111
      %v552 = vmul.f32 %v520, 0.11111111
      %v553 = vmul.f32 %v521, 0.11111111
      %v554 = vmul.f32 %v522, 0.11111111
      %v555 = vmul.f32 %v523, 0.11111111
      %v556 = vmul.f32 %v524, 0.11111111
      %v557 = vmul.f32 %v525, 0.11111111
      %v558 = vmul.f32 %v526, 0.11111111
      %v559 = vmul.f32 %v527, 0.11111111
      %v560 = vmul.f32 %v528, 0.11111111
      %v561 = vmul.f32 %v529, 0.11111111
      %v562 = vmul.f32 %v530, 0.11111111
      %v563 = vmul.f32 %v531, 0.11111111
      %v564 = vmul.f32 %v532, 0.11111111
      %v565 = vmul.f32 %v533, 0.11111111
      %vm566 = vcmask 64512
      %567 = vst.msk [vmem:[%s147] sm:$0xff] %vm566, %v534
      %568 = vst.msk [vmem:[%s147 + $0x8] sm:$0xff] %vm566, %v535
      %569 = vst.msk [vmem:[%s147 + $0x10] sm:$0xff] %vm566, %v536
      %570 = vst.msk [vmem:[%s147 + $0x18] sm:$0xff] %vm566, %v537
      %571 = vst.msk [vmem:[%s147 + $0x20] sm:$0xff] %vm566, %v538
      %572 = vst.msk [vmem:[%s147 + $0x28] sm:$0xff] %vm566, %v539
      %573 = vst.msk [vmem:[%s147 + $0x30] sm:$0xff] %vm566, %v540
      %574 = vst.msk [vmem:[%s147 + $0x38] sm:$0xff] %vm566, %v541
      %575 = vst.msk [vmem:[%s147 + $0x40] sm:$0xff] %vm566, %v542
      %576 = vst.msk [vmem:[%s147 + $0x48] sm:$0xff] %vm566, %v543
      %577 = vst.msk [vmem:[%s147 + $0x50] sm:$0xff] %vm566, %v544
      %578 = vst.msk [vmem:[%s147 + $0x58] sm:$0xff] %vm566, %v545
      %579 = vst.msk [vmem:[%s147 + $0x60] sm:$0xff] %vm566, %v546
      %580 = vst.msk [vmem:[%s147 + $0x68] sm:$0xff] %vm566, %v547
      %581 = vst.msk [vmem:[%s147 + $0x70] sm:$0xff] %vm566, %v548
      %582 = vst.msk [vmem:[%s147 + $0x78] sm:$0xff] %vm566, %v549
      %583 = vst.msk [vmem:[%s147 + $0x80] sm:$0xff] %vm566, %v550
      %584 = vst.msk [vmem:[%s147 + $0x88] sm:$0xff] %vm566, %v551
      %585 = vst.msk [vmem:[%s147 + $0x90] sm:$0xff] %vm566, %v552
      %586 = vst.msk [vmem:[%s147 + $0x98] sm:$0xff] %vm566, %v553
      %587 = vst.msk [vmem:[%s147 + $0xa0] sm:$0xff] %vm566, %v554
      %588 = vst.msk [vmem:[%s147 + $0xa8] sm:$0xff] %vm566, %v555
      %589 = vst.msk [vmem:[%s147 + $0xb0] sm:$0xff] %vm566, %v556
      %590 = vst.msk [vmem:[%s147 + $0xb8] sm:$0xff] %vm566, %v557
      %591 = vst.msk [vmem:[%s147 + $0xc0] sm:$0xff] %vm566, %v558
      %592 = vst.msk [vmem:[%s147 + $0xc8] sm:$0xff] %vm566, %v559
      %593 = vst.msk [vmem:[%s147 + $0xd0] sm:$0xff] %vm566, %v560
      %594 = vst.msk [vmem:[%s147 + $0xd8] sm:$0xff] %vm566, %v561
      %595 = vst.msk [vmem:[%s147 + $0xe0] sm:$0xff] %vm566, %v562
      %596 = vst.msk [vmem:[%s147 + $0xe8] sm:$0xff] %vm566, %v563
      %597 = vst.msk [vmem:[%s147 + $0xf0] sm:$0xff] %vm566, %v564
      %598 = vst.msk [vmem:[%s147 + $0xf8] sm:$0xff] %vm566, %v565
      %p599 = scmp.lt.s32.totalorder %s16, 1
      %s600 = scalar_select %p599, %s16, 1
      %p601 = scmp.lt.s32.totalorder %s17, 0
      %s602 = scalar_select %p601, %s17, 0
      %s603 = smul.addr %s600, 32
      %s604 = sadd.s32 %s602, %s603
      %s605 = smul.addr %s604, 8
      %s606 = scalar_lea.vmem %s1, %s605
      // Predicated region
      $region25: #{patchcore_forward.4} parent=23 // pred_check
        %p607 = pneg %p72
      $region26: #{patchcore_forward.4} parent=23 // pred_check_branch
        %609 = sbr.rel (%p607) target = $region28
      $region27: #{patchcore_forward.4} parent=23 // pred_region
        _
      $region28: #{patchcore_forward.4} parent=23 // pred_fallthru
        _
    $region24: #{patchcore_forward.4} parent=5 // pred_fallthru
      _
    %p610 = scmp.le.s32.totalorder 2, %s7
    // Predicated region
    $region29: #{patchcore_forward.4} parent=5 // pred_check
      %p611 = pneg %p610
    $region30: #{patchcore_forward.4} parent=5 // pred_check_branch
      %613 = sbr.rel (%p611) target = $region32
    $region31: #{patchcore_forward.4} parent=5 // pred_region
      %s614 = ssub.s32 %s7, 2
      // Predicated region
      $region33: #{patchcore_forward.4} parent=31 // pred_check
        %p615 = pneg %p78
      $region34: #{patchcore_forward.4} parent=31 // pred_check_branch
        %617 = sbr.rel (%p615) target = $region36
      $region35: #{patchcore_forward.4} parent=31 // pred_region
        %p618 = scmp.lt.s32.totalorder %s18, 1
        %s619 = scalar_select %p618, %s18, 1
        %p620 = scmp.lt.s32.totalorder %s19, 0
        %s621 = scalar_select %p620, %s19, 0
        %s622 = smul.addr %s619, 32
        %s623 = sadd.s32 %s621, %s622
        %s624 = smul.addr %s623, 8
        %s625 = scalar_lea.vmem %s1, %s624
      $region36: #{patchcore_forward.4} parent=31 // pred_fallthru
        _
    $region32: #{patchcore_forward.4} parent=5 // pred_fallthru
      _
  $region6: #{patchcore_forward.4} parent=0 // loop_footer
    %s11 = sadd.s32 1, %s7
  $region7: #{patchcore_forward.4} parent=0 // loop_footer_branch
    %6 = sbr.rel target = $region3
  $region8: #{patchcore_forward.4} parent=0 // loop_exit
    _

// kernel: patchcore_forward.5
$region0: #{patchcore_forward.5}
  #allocation0 [shape = 'u32[]', space=smem, size = 0x4, offset = 0x4, fixed_abs, tag = 'smem constant byte address 0x4 - core index']
  #allocation1 [shape = 'u32[144,128]{1,0:T(1,128)}', space=vmem, size = 0x12000, scoped, tag = 'internal scratch']
  %s0 = inlined_call_operand.vmem [shape: f32[2,8,8,16], index: 0, kind: input, shape index: {}]
  %s1 = inlined_call_operand.vmem [shape: f32[2,8,8,16], index: 1, kind: output, shape index: {}]
  %s2 = sld [smem:[#allocation0]]
  $region37: #{patchcore_forward.5} parent=0
    _
  %s4 = ssub.s32 1, %s2
  %s5 = scalar_select 0, %s4, %s2
  loop: start=0, step=1, limit=4
  $region2: #{patchcore_forward.5} parent=0 // loop_pre_header
    _
  $region3: #{patchcore_forward.5} parent=0 // loop_header
    %s7 = sphi 0, %s11
    %p8 = scmp.ge.s32.totalorder %s7, 4
    %s14 = sphi 0, %s26
    %s15 = sphi 0, %s22
    %s16 = sphi 0, %s14
    %s17 = sphi 0, %s15
    %s18 = sphi 0, %s16
    %s19 = sphi 0, %s17
    %s31 = sphi 0, %s33
    %s34 = sphi 0, %s31
    %s35 = sphi 0, %s34
    %s51 = sphi 0, %s35
    %s59 = sphi 0, %s61
    %s62 = sphi 0, %s59
    %s63 = sphi 0, %s62
    %s79 = sphi 0, %s63
  $region4: #{patchcore_forward.5} parent=0 // loop_header_branch
    %10 = sbr.rel (%p8) target = $region8
  $region5: #{patchcore_forward.5} parent=0 // loop_body
    %s12 = ssub.s32 %s7, 1
    %s13 = ssub.s32 %s7, 2
    %s20 = sadd.s32 1, %s15
    %p21 = scmp.ge.s32.totalorder %s20, 1
    %s22 = scalar_select %p21, 0, %s20
    %s23 = sadd.s32 1, %s14
    %s24 = scalar_select %p21, %s23, %s14
    %p25 = scmp.ge.s32.totalorder %s24, 2
    %s26 = scalar_select %p25, 0, %s24
    %s27 = ssub.s32 %s14, %s26
    %s28 = ssub.s32 %s15, %s22
    %s29 = sor.u32 %s27, %s28
    %p30 = scmp.eq.s32.totalorder %s29, 0
    %s32 = sadd.s32 %s31, 1
    %s33 = scalar_select %p30, %s31, %s32
    %p36 = pneg %p30
    %p37 = scmp.eq.s32.totalorder %s7, 1
    %p38 = por %p36, %p37
    %p39 = scmp.ne.s32.totalorder %s31, %s34
    %p40 = scmp.eq.s32.totalorder %s7, 0
    %p41 = por %p39, %p40
    %p42 = scmp.ne.s32.totalorder %s31, %s34
    %p43 = scmp.eq.s32.totalorder %s12, 1
    %p44 = por %p42, %p43
    %p45 = scmp.ne.s32.totalorder %s34, %s35
    %p46 = scmp.eq.s32.totalorder %s12, 0
    %p47 = por %p45, %p46
    %p48 = scmp.ne.s32.totalorder %s34, %s35
    %p49 = scmp.eq.s32.totalorder %s13, 1
    %p50 = por %p48, %p49
    %p52 = scmp.ne.s32.totalorder %s35, %s51
    %p53 = scmp.eq.s32.totalorder %s13, 0
    %p54 = por %p52, %p53
    %s55 = ssub.s32 %s14, %s26
    %s56 = ssub.s32 %s15, %s22
    %s57 = sor.u32 %s55, %s56
    %p58 = scmp.eq.s32.totalorder %s57, 0
    %s60 = sadd.s32 %s59, 1
    %s61 = scalar_select %p58, %s59, %s60
    %p64 = pneg %p58
    %p65 = scmp.eq.s32.totalorder %s7, 1
    %p66 = por %p64, %p65
    %p67 = scmp.ne.s32.totalorder %s59, %s62
    %p68 = scmp.eq.s32.totalorder %s7, 0
    %p69 = por %p67, %p68
    %p70 = scmp.ne.s32.totalorder %s59, %s62
    %p71 = scmp.eq.s32.totalorder %s12, 1
    %p72 = por %p70, %p71
    %p73 = scmp.ne.s32.totalorder %s62, %s63
    %p74 = scmp.eq.s32.totalorder %s12, 0
    %p75 = por %p73, %p74
    %p76 = scmp.ne.s32.totalorder %s62, %s63
    %p77 = scmp.eq.s32.totalorder %s13, 1
    %p78 = por %p76, %p77
    %p80 = scmp.ne.s32.totalorder %s63, %s79
    %p81 = scmp.eq.s32.totalorder %s13, 0
    %p82 = por %p80, %p81
    %p83 = scmp.le.s32.totalorder 1, %s7
    %p84 = scmp.lt.s32.totalorder %s7, 3
    %p85 = pnand %p83, %p84
    %p86 = pneg %p85
    // Predicated region
    $region9: #{patchcore_forward.5} parent=5 // pred_check
      _
    $region10: #{patchcore_forward.5} parent=5 // pred_check_branch
      %88 = sbr.rel (%p85) target = $region12
    $region11: #{patchcore_forward.5} parent=5 // pred_region
      %s89 = ssub.s32 %s7, 1
    $region12: #{patchcore_forward.5} parent=5 // pred_fallthru
      _
    %p90 = scmp.lt.s32.totalorder %s7, 2
    // Predicated region
    $region13: #{patchcore_forward.5} parent=5 // pred_check
      %p91 = pneg %p90
    $region14: #{patchcore_forward.5} parent=5 // pred_check_branch
      %93 = sbr.rel (%p91) target = $region16
    $region15: #{patchcore_forward.5} parent=5 // pred_region
      // Predicated region
      $region17: #{patchcore_forward.5} parent=15 // pred_check
        %p94 = pneg %p41
      $region18: #{patchcore_forward.5} parent=15 // pred_check_branch
        %96 = sbr.rel (%p94) target = $region20
      $region19: #{patchcore_forward.5} parent=15 // pred_region
        %p97 = scmp.lt.s32.totalorder %s14, 1
        %s98 = scalar_select %p97, %s14, 1
        %p99 = scmp.lt.s32.totalorder %s15, 0
        %s100 = scalar_select %p99, %s15, 0
        %s101 = smul.addr %s98, 8
        %s102 = sadd.s32 %s100, %s101
        %s103 = smul.addr %s102, 8
        %s104 = scalar_lea.vmem %s0, %s103
      $region20: #{patchcore_forward.5} parent=15 // pred_fallthru
        _
    $region16: #{patchcore_forward.5} parent=5 // pred_fallthru
      _
    %p105 = scmp.le.s32.totalorder 1, %s7
    %p106 = scmp.lt.s32.totalorder %s7, 3
    %p107 = pnand %p105, %p106
    %p108 = pneg %p107
    // Predicated region
    $region21: #{patchcore_forward.5} parent=5 // pred_check
      _
    $region22: #{patchcore_forward.5} parent=5 // pred_check_branch
      %110 = sbr.rel (%p107) target = $region24
    $region23: #{patchcore_forward.5} parent=5 // pred_region
      %s111 = ssub.s32 %s7, 1
      %p112 = scmp.lt.s32.totalorder %s16, 1
      %s113 = scalar_select %p112, %s16, 1
      %p114 = scmp.lt.s32.totalorder %s17, 0
      %s115 = scalar_select %p114, %s17, 0
      %s116 = smul.addr %s113, 8
      %s117 = sadd.s32 %s115, %s116
      %s118 = smul.addr %s117, 8
      %s119 = scalar_lea.vmem %s0, %s118
      %p120 = pneg %p47
      %p121 = pneg %p44
      %p122 = pneg %p75
      %p123 = pneg %p72
      %p124 = scmp.lt.s32.totalorder %s16, 1
      %s125 = scalar_select %p124, %s16, 1
      %p126 = scmp.lt.s32.totalorder %s17, 0
      %s127 = scalar_select %p126, %s17, 0
      %s128 = smul.addr %s125, 8
      %s129 = sadd.s32 %s127, %s128
      %s130 = smul.addr %s129, 8
      %s131 = scalar_lea.vmem %s1, %s130
      %p132 = scmp.lt.s32.totalorder %s16, 1
      %s133 = scalar_select %p132, %s16, 1
      %p134 = scmp.lt.s32.totalorder %s17, 0
      %s135 = scalar_select %p134, %s17, 0
      %s136 = smul.addr %s133, 8
      %s137 = sadd.s32 %s135, %s136
      %s138 = smul.addr %s137, 8
      %s139 = scalar_lea.vmem %s0, %s138
      %p140 = scmp.lt.s32.totalorder %s16, 1
      %s141 = scalar_select %p140, %s16, 1
      %p142 = scmp.lt.s32.totalorder %s17, 0
      %s143 = scalar_select %p142, %s17, 0
      %s144 = smul.addr %s141, 8
      %s145 = sadd.s32 %s143, %s144
      %s146 = smul.addr %s145, 8
      %s147 = scalar_lea.vmem %s1, %s146
      %v148 = vld [vmem:[%s139] sm:$0xff]
      %v149 = vld [vmem:[%s139 + $0x8] sm:$0xff]
      %v150 = vld [vmem:[%s139 + $0x10] sm:$0xff]
      %v151 = vld [vmem:[%s139 + $0x18] sm:$0xff]
      %v152 = vld [vmem:[%s139 + $0x20] sm:$0xff]
      %v153 = vld [vmem:[%s139 + $0x28] sm:$0xff]
      %v154 = vld [vmem:[%s139 + $0x30] sm:$0xff]
      %v155 = vld [vmem:[%s139 + $0x38] sm:$0xff]
      %v156 = vadd.f32 %v148, %v149
      %v157 = vadd.f32 %v149, %v150
      %v158 = vadd.f32 %v150, %v151
      %v159 = vadd.f32 %v151, %v152
      %v160 = vadd.f32 %v152, %v153
      %v161 = vadd.f32 %v153, %v154
      %v162 = vadd.f32 %v154, %v155
      %v163 = vadd.f32 %v155, 0.0
      %v164 = vadd.f32 %v156, 0.0
      %v165 = vadd.f32 %v157, %v148
      %v166 = vadd.f32 %v158, %v149
      %v167 = vadd.f32 %v159, %v150
      %v168 = vadd.f32 %v160, %v151
      %v169 = vadd.f32 %v161, %v152
      %v170 = vadd.f32 %v162, %v153
      %v171 = vadd.f32 %v163, %v154
      %v180 = vrot.slane %v164, 1
      %v181 = vrot.slane %v165, 1
      %v182 = vrot.slane %v166, 1
      %v183 = vrot.slane %v167, 1
      %v184 = vrot.slane %v168, 1
      %v185 = vrot.slane %v169, 1
      %v186 = vrot.slane %v170, 1
      %v187 = vrot.slane %v171, 1
      %vm196 = vcmask 1046528
      %v197 = vsel %vm196, %v180, 0.0
      %v198 = vsel %vm196, %v181, 0.0
      %v199 = vsel %vm196, %v182, 0.0
      %v200 = vsel %vm196, %v183, 0.0
      %v201 = vsel %vm196, %v184, 0.0
      %v202 = vsel %vm196, %v185, 0.0
      %v203 = vsel %vm196, %v186, 0.0
      %v204 = vsel %vm196, %v187, 0.0
      %v205 = vadd.f32 %v164, %v197
      %v206 = vadd.f32 %v165, %v198
      %v207 = vadd.f32 %v166, %v199
      %v208 = vadd.f32 %v167, %v200
      %v209 = vadd.f32 %v168, %v201
      %v210 = vadd.f32 %v169, %v202
      %v211 = vadd.f32 %v170, %v203
      %v212 = vadd.f32 %v171, %v204
      %v213 = vrot.slane %v164, 7
      %v214 = vrot.slane %v165, 7
      %v215 = vrot.slane %v166, 7
      %v216 = vrot.slane %v167, 7
      %v217 = vrot.slane %v168, 7
      %v218 = vrot.slane %v169, 7
      %v219 = vrot.slane %v170, 7
      %v220 = vrot.slane %v171, 7
      %vm229 = vcmask 1040384
      %v230 = vsel %vm229, 0.0, %v213
      %v231 = vsel %vm229, 0.0, %v214
      %v232 = vsel %vm229, 0.0, %v215
      %v233 = vsel %vm229, 0.0, %v216
      %v234 = vsel %vm229, 0.0, %v217
      %v235 = vsel %vm229, 0.0, %v218
      %v236 = vsel %vm229, 0.0, %v219
      %v237 = vsel %vm229, 0.0, %v220
      %v238 = vadd.f32 %v205, %v230
      %v239 = vadd.f32 %v206, %v231
      %v240 = vadd.f32 %v207, %v232
      %v241 = vadd.f32 %v208, %v233
      %v242 = vadd.f32 %v209, %v234
      %v243 = vadd.f32 %v210, %v235
      %v244 = vadd.f32 %v211, %v236
      %v245 = vadd.f32 %v212, %v237
      %v246 = vmul.f32 %v238, 0.11111111
      %v247 = vmul.f32 %v239, 0.11111111
      %v248 = vmul.f32 %v240, 0.11111111
      %v249 = vmul.f32 %v241, 0.11111111
      %v250 = vmul.f32 %v242, 0.11111111
      %v251 = vmul.f32 %v243, 0.11111111
      %v252 = vmul.f32 %v244, 0.11111111
      %v253 = vmul.f32 %v245, 0.11111111
      %vm254 = vcmask 130048
      %255 = vst.msk [vmem:[%s147] sm:$0xff] %vm254, %v246
      %256 = vst.msk [vmem:[%s147 + $0x8] sm:$0xff] %vm254, %v247
      %257 = vst.msk [vmem:[%s147 + $0x10] sm:$0xff] %vm254, %v248
      %258 = vst.msk [vmem:[%s147 + $0x18] sm:$0xff] %vm254, %v249
      %259 = vst.msk [vmem:[%s147 + $0x20] sm:$0xff] %vm254, %v250
      %260 = vst.msk [vmem:[%s147 + $0x28] sm:$0xff] %vm254, %v251
      %261 = vst.msk [vmem:[%s147 + $0x30] sm:$0xff] %vm254, %v252
      %262 = vst.msk [vmem:[%s147 + $0x38] sm:$0xff] %vm254, %v253
      %p263 = scmp.lt.s32.totalorder %s16, 1
      %s264 = scalar_select %p263, %s16, 1
      %p265 = scmp.lt.s32.totalorder %s17, 0
      %s266 = scalar_select %p265, %s17, 0
      %s267 = smul.addr %s264, 8
      %s268 = sadd.s32 %s266, %s267
      %s269 = smul.addr %s268, 8
      %s270 = scalar_lea.vmem %s1, %s269
      // Predicated region
      $region25: #{patchcore_forward.5} parent=23 // pred_check
        %p271 = pneg %p72
      $region26: #{patchcore_forward.5} parent=23 // pred_check_branch
        %273 = sbr.rel (%p271) target = $region28
      $region27: #{patchcore_forward.5} parent=23 // pred_region
        _
      $region28: #{patchcore_forward.5} parent=23 // pred_fallthru
        _
    $region24: #{patchcore_forward.5} parent=5 // pred_fallthru
      _
    %p274 = scmp.le.s32.totalorder 2, %s7
    // Predicated region
    $region29: #{patchcore_forward.5} parent=5 // pred_check
      %p275 = pneg %p274
    $region30: #{patchcore_forward.5} parent=5 // pred_check_branch
      %277 = sbr.rel (%p275) target = $region32
    $region31: #{patchcore_forward.5} parent=5 // pred_region
      %s278 = ssub.s32 %s7, 2
      // Predicated region
      $region33: #{patchcore_forward.5} parent=31 // pred_check
        %p279 = pneg %p78
      $region34: #{patchcore_forward.5} parent=31 // pred_check_branch
        %281 = sbr.rel (%p279) target = $region36
      $region35: #{patchcore_forward.5} parent=31 // pred_region
        %p282 = scmp.lt.s32.totalorder %s18, 1
        %s283 = scalar_select %p282, %s18, 1
        %p284 = scmp.lt.s32.totalorder %s19, 0
        %s285 = scalar_select %p284, %s19, 0
        %s286 = smul.addr %s283, 8
        %s287 = sadd.s32 %s285, %s286
        %s288 = smul.addr %s287, 8
        %s289 = scalar_lea.vmem %s1, %s288
      $region36: #{patchcore_forward.5} parent=31 // pred_fallthru
        _
    $region32: #{patchcore_forward.5} parent=5 // pred_fallthru
      _
  $region6: #{patchcore_forward.5} parent=0 // loop_footer
    %s11 = sadd.s32 1, %s7
  $region7: #{patchcore_forward.5} parent=0 // loop_footer_branch
    %6 = sbr.rel target = $region3
  $region8: #{patchcore_forward.5} parent=0 // loop_exit
    _

// kernel: patchcore_forward.6
$region0: #{patchcore_forward.6}
  #allocation0 [shape = 'u32[]', space=smem, size = 0x4, offset = 0x4, fixed_abs, tag = 'smem constant byte address 0x4 - core index']
  #allocation1 [shape = 'u32[144,128]{1,0:T(1,128)}', space=vmem, size = 0x12000, scoped, tag = 'internal scratch']
  #allocation2 [shape = 'f32[1,256]{1,0:T(1,128)}', space=vmem, size = 0x400, scoped, tag = 'scratch operand']
  #allocation3 [shape = 's32[1,256]{1,0:T(1,128)}', space=vmem, size = 0x400, scoped, tag = 'scratch operand']
  %s0 = inlined_call_operand.vmem [shape: f32[1,512], index: 0, kind: input, shape index: {}]
  %s1 = inlined_call_operand.vmem [shape: bf16[128,512], index: 1, kind: input, shape index: {}]
  %s2 = inlined_call_operand.vmem [shape: bf16[128,128], index: 2, kind: input, shape index: {}]
  %s3 = inlined_call_operand.vmem [shape: f32[128,1], index: 3, kind: input, shape index: {}]
  %s4 = inlined_call_operand.vmem [shape: f32[1,512], index: 4, kind: output, shape index: {0}]
  %s5 = inlined_call_operand.vmem [shape: s32[1,512], index: 5, kind: output, shape index: {1}]
  %6 = xla_tuple %s4, %s5
  %s7 = sld [smem:[#allocation0]]
  $region103: #{patchcore_forward.6} parent=0
    _
  %s9 = ssub.s32 1, %s7
  %s10 = scalar_select 0, %s9, %s7
  $region1: #{patchcore_forward.6} parent=0
    #allocation4 [shape = 'u8[131072]{0}', space=vmem, size = 0x20000, scoped, tag = 'input window, operand 1']
    loop: start=0, step=1, limit=4
    $region2: #{patchcore_forward.6} parent=1 // loop_pre_header
      _
    $region3: #{patchcore_forward.6} parent=1 // loop_header
      %s12 = sphi 0, %s16
      %p13 = scmp.ge.s32.totalorder %s12, 4
      %s19 = sphi 0, %s31
      %s20 = sphi 0, %s27
      %s21 = sphi 0, %s19
      %s22 = sphi 0, %s20
      %s23 = sphi 0, %s21
      %s24 = sphi 0, %s22
      %s34 = sphi 0, %s36
      %s37 = sphi 0, %s34
      %s38 = sphi 0, %s37
      %s54 = sphi 0, %s38
      %s60 = sphi 0, %s62
      %s63 = sphi 0, %s60
      %s64 = sphi 0, %s63
      %s80 = sphi 0, %s64
      %s86 = sphi 0, %s88
      %s89 = sphi 0, %s86
      %s90 = sphi 0, %s89
      %s106 = sphi 0, %s90
      %s112 = sphi 0, %s114
      %s115 = sphi 0, %s112
      %s116 = sphi 0, %s115
      %s132 = sphi 0, %s116
      %s138 = sphi 0, %s140
      %s141 = sphi 0, %s138
      %s142 = sphi 0, %s141
      %s158 = sphi 0, %s142
      %s164 = sphi 0, %s166
      %s167 = sphi 0, %s164
      %s168 = sphi 0, %s167
      %s184 = sphi 0, %s168
    $region4: #{patchcore_forward.6} parent=1 // loop_header_branch
      %15 = sbr.rel (%p13) target = $region8
    $region5: #{patchcore_forward.6} parent=1 // loop_body
      %s17 = ssub.s32 %s12, 1
      %s18 = ssub.s32 %s12, 2
      %s25 = sadd.s32 1, %s20
      %p26 = scmp.ge.s32.totalorder %s25, 1
      %s27 = scalar_select %p26, 0, %s25
      %s28 = sadd.s32 1, %s19
      %s29 = scalar_select %p26, %s28, %s19
      %p30 = scmp.ge.s32.totalorder %s29, 2
      %s31 = scalar_select %p30, 0, %s29
      %s32 = ssub.s32 %s19, %s31
      %p33 = scmp.eq.s32.totalorder %s32, 0
      %s35 = sadd.s32 %s34, 1
      %s36 = scalar_select %p33, %s34, %s35
      %p39 = pneg %p33
      %p40 = scmp.eq.s32.totalorder %s12, 1
      %p41 = por %p39, %p40
      %p42 = scmp.ne.s32.totalorder %s34, %s37
      %p43 = scmp.eq.s32.totalorder %s12, 0
      %p44 = por %p42, %p43
      %p45 = scmp.ne.s32.totalorder %s34, %s37
      %p46 = scmp.eq.s32.totalorder %s17, 1
      %p47 = por %p45, %p46
      %p48 = scmp.ne.s32.totalorder %s37, %s38
      %p49 = scmp.eq.s32.totalorder %s17, 0
      %p50 = por %p48, %p49
      %p51 = scmp.ne.s32.totalorder %s37, %s38
      %p52 = scmp.eq.s32.totalorder %s18, 1
      %p53 = por %p51, %p52
      %p55 = scmp.ne.s32.totalorder %s38, %s54
      %p56 = scmp.eq.s32.totalorder %s18, 0
      %p57 = por %p55, %p56
      %s58 = ssub.s32 %s19, %s31
      %p59 = scmp.eq.s32.totalorder %s58, 0
      %s61 = sadd.s32 %s60, 1
      %s62 = scalar_select %p59, %s60, %s61
      %p65 = pneg %p59
      %p66 = scmp.eq.s32.totalorder %s12, 1
      %p67 = por %p65, %p66
      %p68 = scmp.ne.s32.totalorder %s60, %s63
      %p69 = scmp.eq.s32.totalorder %s12, 0
      %p70 = por %p68, %p69
      %p71 = scmp.ne.s32.totalorder %s60, %s63
      %p72 = scmp.eq.s32.totalorder %s17, 1
      %p73 = por %p71, %p72
      %p74 = scmp.ne.s32.totalorder %s63, %s64
      %p75 = scmp.eq.s32.totalorder %s17, 0
      %p76 = por %p74, %p75
      %p77 = scmp.ne.s32.totalorder %s63, %s64
      %p78 = scmp.eq.s32.totalorder %s18, 1
      %p79 = por %p77, %p78
      %p81 = scmp.ne.s32.totalorder %s64, %s80
      %p82 = scmp.eq.s32.totalorder %s18, 0
      %p83 = por %p81, %p82
      %s84 = ssub.s32 %s20, %s27
      %p85 = scmp.eq.s32.totalorder %s84, 0
      %s87 = sadd.s32 %s86, 1
      %s88 = scalar_select %p85, %s86, %s87
      %p91 = pneg %p85
      %p92 = scmp.eq.s32.totalorder %s12, 1
      %p93 = por %p91, %p92
      %p94 = scmp.ne.s32.totalorder %s86, %s89
      %p95 = scmp.eq.s32.totalorder %s12, 0
      %p96 = por %p94, %p95
      %p97 = scmp.ne.s32.totalorder %s86, %s89
      %p98 = scmp.eq.s32.totalorder %s17, 1
      %p99 = por %p97, %p98
      %p100 = scmp.ne.s32.totalorder %s89, %s90
      %p101 = scmp.eq.s32.totalorder %s17, 0
      %p102 = por %p100, %p101
      %p103 = scmp.ne.s32.totalorder %s89, %s90
      %p104 = scmp.eq.s32.totalorder %s18, 1
      %p105 = por %p103, %p104
      %p107 = scmp.ne.s32.totalorder %s90, %s106
      %p108 = scmp.eq.s32.totalorder %s18, 0
      %p109 = por %p107, %p108
      %s110 = ssub.s32 %s20, %s27
      %p111 = scmp.eq.s32.totalorder %s110, 0
      %s113 = sadd.s32 %s112, 1
      %s114 = scalar_select %p111, %s112, %s113
      %p117 = pneg %p111
      %p118 = scmp.eq.s32.totalorder %s12, 1
      %p119 = por %p117, %p118
      %p120 = scmp.ne.s32.totalorder %s112, %s115
      %p121 = scmp.eq.s32.totalorder %s12, 0
      %p122 = por %p120, %p121
      %p123 = scmp.ne.s32.totalorder %s112, %s115
      %p124 = scmp.eq.s32.totalorder %s17, 1
      %p125 = por %p123, %p124
      %p126 = scmp.ne.s32.totalorder %s115, %s116
      %p127 = scmp.eq.s32.totalorder %s17, 0
      %p128 = por %p126, %p127
      %p129 = scmp.ne.s32.totalorder %s115, %s116
      %p130 = scmp.eq.s32.totalorder %s18, 1
      %p131 = por %p129, %p130
      %p133 = scmp.ne.s32.totalorder %s116, %s132
      %p134 = scmp.eq.s32.totalorder %s18, 0
      %p135 = por %p133, %p134
      %s136 = ssub.s32 %s19, %s31
      %p137 = scmp.eq.s32.totalorder %s136, 0
      %s139 = sadd.s32 %s138, 1
      %s140 = scalar_select %p137, %s138, %s139
      %p143 = pneg %p137
      %p144 = scmp.eq.s32.totalorder %s12, 1
      %p145 = por %p143, %p144
      %p146 = scmp.ne.s32.totalorder %s138, %s141
      %p147 = scmp.eq.s32.totalorder %s12, 0
      %p148 = por %p146, %p147
      %p149 = scmp.ne.s32.totalorder %s138, %s141
      %p150 = scmp.eq.s32.totalorder %s17, 1
      %p151 = por %p149, %p150
      %p152 = scmp.ne.s32.totalorder %s141, %s142
      %p153 = scmp.eq.s32.totalorder %s17, 0
      %p154 = por %p152, %p153
      %p155 = scmp.ne.s32.totalorder %s141, %s142
      %p156 = scmp.eq.s32.totalorder %s18, 1
      %p157 = por %p155, %p156
      %p159 = scmp.ne.s32.totalorder %s142, %s158
      %p160 = scmp.eq.s32.totalorder %s18, 0
      %p161 = por %p159, %p160
      %s162 = ssub.s32 %s19, %s31
      %p163 = scmp.eq.s32.totalorder %s162, 0
      %s165 = sadd.s32 %s164, 1
      %s166 = scalar_select %p163, %s164, %s165
      %p169 = pneg %p163
      %p170 = scmp.eq.s32.totalorder %s12, 1
      %p171 = por %p169, %p170
      %p172 = scmp.ne.s32.totalorder %s164, %s167
      %p173 = scmp.eq.s32.totalorder %s12, 0
      %p174 = por %p172, %p173
      %p175 = scmp.ne.s32.totalorder %s164, %s167
      %p176 = scmp.eq.s32.totalorder %s17, 1
      %p177 = por %p175, %p176
      %p178 = scmp.ne.s32.totalorder %s167, %s168
      %p179 = scmp.eq.s32.totalorder %s17, 0
      %p180 = por %p178, %p179
      %p181 = scmp.ne.s32.totalorder %s167, %s168
      %p182 = scmp.eq.s32.totalorder %s18, 1
      %p183 = por %p181, %p182
      %p185 = scmp.ne.s32.totalorder %s168, %s184
      %p186 = scmp.eq.s32.totalorder %s18, 0
      %p187 = por %p185, %p186
      %p188 = scmp.le.s32.totalorder 1, %s12
      %p189 = scmp.lt.s32.totalorder %s12, 3
      %p190 = pnand %p188, %p189
      %p191 = pneg %p190
      // Predicated region
      $region9: #{patchcore_forward.6} parent=5 // pred_check
        _
      $region10: #{patchcore_forward.6} parent=5 // pred_check_branch
        %193 = sbr.rel (%p190) target = $region12
      $region11: #{patchcore_forward.6} parent=5 // pred_region
        %s194 = ssub.s32 %s12, 1
        // Predicated region
        $region13: #{patchcore_forward.6} parent=11 // pred_check
          %p195 = pneg %p102
        $region14: #{patchcore_forward.6} parent=11 // pred_check_branch
          %197 = sbr.rel (%p195) target = $region16
        $region15: #{patchcore_forward.6} parent=11 // pred_region
          %s198 = smul.u32 16, %s22
          %p199 = scmp.lt.s32.totalorder %s198, 15
          %s200 = scalar_select %p199, %s198, 15
          %s201 = smul.addr %s200, 4
          %s202 = scalar_lea.vmem %s2, %s201
          %s203 = smul.u32 16, %s22
        $region16: #{patchcore_forward.6} parent=11 // pred_fallthru
          _
        // Predicated region
        $region17: #{patchcore_forward.6} parent=11 // pred_check
          %p204 = pneg %p128
        $region18: #{patchcore_forward.6} parent=11 // pred_check_branch
          %206 = sbr.rel (%p204) target = $region20
        $region19: #{patchcore_forward.6} parent=11 // pred_region
          %s207 = smul.u32 16, %s22
          %p208 = scmp.lt.s32.totalorder %s207, 15
          %s209 = scalar_select %p208, %s207, 15
          %s210 = smul.addr %s209, 8
          %s211 = scalar_lea.vmem %s3, %s210
          %s212 = smul.u32 16, %s22
        $region20: #{patchcore_forward.6} parent=11 // pred_fallthru
          _
      $region12: #{patchcore_forward.6} parent=5 // pred_fallthru
        _
      %p213 = scmp.lt.s32.totalorder %s12, 2
      // Predicated region
      $region21: #{patchcore_forward.6} parent=5 // pred_check
        %p214 = pneg %p213
      $region22: #{patchcore_forward.6} parent=5 // pred_check_branch
        %216 = sbr.rel (%p214) target = $region24
      $region23: #{patchcore_forward.6} parent=5 // pred_region
        // Predicated region
        $region25: #{patchcore_forward.6} parent=23 // pred_check
          %p217 = pneg %p44
        $region26: #{patchcore_forward.6} parent=23 // pred_check_branch
          %219 = sbr.rel (%p217) target = $region28
        $region27: #{patchcore_forward.6} parent=23 // pred_region
          %s220 = smul.u32 2, %s19
          %p221 = scmp.lt.s32.totalorder %s220, 3
          %s222 = scalar_select %p221, %s220, 3
          %s223 = scalar_lea.vmem %s0, %s222
          %s224 = smul.u32 2, %s19
        $region28: #{patchcore_forward.6} parent=23 // pred_fallthru
          _
        // Predicated region
        $region29: #{patchcore_forward.6} parent=23 // pred_check
          %p225 = pneg %p70
        $region30: #{patchcore_forward.6} parent=23 // pred_check_branch
          %227 = sbr.rel (%p225) target = $region32
        $region31: #{patchcore_forward.6} parent=23 // pred_region
          %s228 = sand.u32 %s60, 1
          %s229 = sand.u32 %s60, 1
          %s230 = smul.addr %s229, 128
          %s231 = scalar_lea.vmem [#allocation4], %s230
          %s232 = smul.u32 2, %s19
          %s233 = smul.addr %s232, 4
          %s234 = scalar_lea.vmem %s1, %s233
          // Predicated region
          $region33: #{patchcore_forward.6} parent=31 // pred_check
            _
          $region34: #{patchcore_forward.6} parent=31 // pred_check_branch
            %236 = sbr.rel (0) target = $region36
          $region35: #{patchcore_forward.6} parent=31 // pred_region
            // Predicated region
            $region37: #{patchcore_forward.6} parent=35 // pred_check
              _
            $region38: #{patchcore_forward.6} parent=35 // pred_check_branch
              %238 = sbr.rel (0) target = $region40
            $region39: #{patchcore_forward.6} parent=35 // pred_region
              // Predicated region
              $region52: #{patchcore_forward.6} parent=39 // pred_check
                _
              $region53: #{patchcore_forward.6} parent=39 // pred_check_branch
                %283 = sbr.rel (0) target = $region55
              $region54: #{patchcore_forward.6} parent=39 // pred_region
                loop: start=0, step=1, limit=1
                $region56: #{patchcore_forward.6} parent=54 // loop_pre_header
                  _
                $region57: #{patchcore_forward.6} parent=54 // loop_header
                  %s285 = sphi 0, %s289
                  %p286 = scmp.ge.s32.totalorder %s285, 1
                  %s290 = sphi %s234, %s234
                  %s291 = sphi %s231, %s231
                $region58: #{patchcore_forward.6} parent=54 // loop_header_branch
                  %288 = sbr.rel (%p286) target = $region62
                $region59: #{patchcore_forward.6} parent=54 // loop_body
                  %v292 = vld [vmem:[%s290] sm:$0xff]
                  %293 = vst [vmem:[%s291] sm:$0xff] %v292
                  %v294 = vld [vmem:[%s290 + $0x10] sm:$0xff]
                  %295 = vst [vmem:[%s291 + $0x8] sm:$0xff] %v294
                  %v296 = vld [vmem:[%s290 + $0x20] sm:$0xff]
                  %297 = vst [vmem:[%s291 + $0x10] sm:$0xff] %v296
                  %v298 = vld [vmem:[%s290 + $0x30] sm:$0xff]
                  %299 = vst [vmem:[%s291 + $0x18] sm:$0xff] %v298
                  %v300 = vld [vmem:[%s290 + $0x40] sm:$0xff]
                  %301 = vst [vmem:[%s291 + $0x20] sm:$0xff] %v300
                  %v302 = vld [vmem:[%s290 + $0x50] sm:$0xff]
                  %303 = vst [vmem:[%s291 + $0x28] sm:$0xff] %v302
                  %v304 = vld [vmem:[%s290 + $0x60] sm:$0xff]
                  %305 = vst [vmem:[%s291 + $0x30] sm:$0xff] %v304
                  %v306 = vld [vmem:[%s290 + $0x70] sm:$0xff]
                  %307 = vst [vmem:[%s291 + $0x38] sm:$0xff] %v306
                  %v308 = vld [vmem:[%s290 + $0x80] sm:$0xff]
                  %309 = vst [vmem:[%s291 + $0x40] sm:$0xff] %v308
                  %v310 = vld [vmem:[%s290 + $0x90] sm:$0xff]
                  %311 = vst [vmem:[%s291 + $0x48] sm:$0xff] %v310
                  %v312 = vld [vmem:[%s290 + $0xa0] sm:$0xff]
                  %313 = vst [vmem:[%s291 + $0x50] sm:$0xff] %v312
                  %v314 = vld [vmem:[%s290 + $0xb0] sm:$0xff]
                  %315 = vst [vmem:[%s291 + $0x58] sm:$0xff] %v314
                  %v316 = vld [vmem:[%s290 + $0xc0] sm:$0xff]
                  %317 = vst [vmem:[%s291 + $0x60] sm:$0xff] %v316
                  %v318 = vld [vmem:[%s290 + $0xd0] sm:$0xff]
                  %319 = vst [vmem:[%s291 + $0x68] sm:$0xff] %v318
                  %v320 = vld [vmem:[%s290 + $0xe0] sm:$0xff]
                  %321 = vst [vmem:[%s291 + $0x70] sm:$0xff] %v320
                  %v322 = vld [vmem:[%s290 + $0xf0] sm:$0xff]
                  %323 = vst [vmem:[%s291 + $0x78] sm:$0xff] %v322
                $region60: #{patchcore_forward.6} parent=54 // loop_footer
                  %s289 = sadd.s32 1, %s285
                $region61: #{patchcore_forward.6} parent=54 // loop_footer_branch
                  %284 = sbr.rel target = $region57
                $region62: #{patchcore_forward.6} parent=54 // loop_exit
                  _
              $region55: #{patchcore_forward.6} parent=39 // pred_fallthru
                _
              // Predicated region
              $region63: #{patchcore_forward.6} parent=39 // pred_check
                _
              $region64: #{patchcore_forward.6} parent=39 // pred_check_branch
                %325 = sbr.rel target = $region66
              $region65: #{patchcore_forward.6} parent=39 // pred_region
                _
              $region66: #{patchcore_forward.6} parent=39 // pred_fallthru
                _
            $region40: #{patchcore_forward.6} parent=35 // pred_fallthru
              _
            // Predicated region
            $region41: #{patchcore_forward.6} parent=35 // pred_check
              _
            $region42: #{patchcore_forward.6} parent=35 // pred_check_branch
              %240 = sbr.rel target = $region44
            $region43: #{patchcore_forward.6} parent=35 // pred_region
              loop: start=0, step=1, limit=1
              $region45: #{patchcore_forward.6} parent=43 // loop_pre_header
                _
              $region46: #{patchcore_forward.6} parent=43 // loop_header
                %s243 = sphi 0, %s247
                %p244 = scmp.ge.s32.totalorder %s243, 1
                %s248 = sphi %s234, %s234
                %s249 = sphi %s231, %s231
              $region47: #{patchcore_forward.6} parent=43 // loop_header_branch
                %246 = sbr.rel (%p244) target = $region51
              $region48: #{patchcore_forward.6} parent=43 // loop_body
                %v250 = vld [vmem:[%s248] sm:$0xff]
                %251 = vst [vmem:[%s249] sm:$0xff] %v250
                %v252 = vld [vmem:[%s248 + $0x10] sm:$0xff]
                %253 = vst [vmem:[%s249 + $0x8] sm:$0xff] %v252
                %v254 = vld [vmem:[%s248 + $0x20] sm:$0xff]
                %255 = vst [vmem:[%s249 + $0x10] sm:$0xff] %v254
                %v256 = vld [vmem:[%s248 + $0x30] sm:$0xff]
                %257 = vst [vmem:[%s249 + $0x18] sm:$0xff] %v256
                %v258 = vld [vmem:[%s248 + $0x40] sm:$0xff]
                %259 = vst [vmem:[%s249 + $0x20] sm:$0xff] %v258
                %v260 = vld [vmem:[%s248 + $0x50] sm:$0xff]
                %261 = vst [vmem:[%s249 + $0x28] sm:$0xff] %v260
                %v262 = vld [vmem:[%s248 + $0x60] sm:$0xff]
                %263 = vst [vmem:[%s249 + $0x30] sm:$0xff] %v262
                %v264 = vld [vmem:[%s248 + $0x70] sm:$0xff]
                %265 = vst [vmem:[%s249 + $0x38] sm:$0xff] %v264
                %v266 = vld [vmem:[%s248 + $0x80] sm:$0xff]
                %267 = vst [vmem:[%s249 + $0x40] sm:$0xff] %v266
                %v268 = vld [vmem:[%s248 + $0x90] sm:$0xff]
                %269 = vst [vmem:[%s249 + $0x48] sm:$0xff] %v268
                %v270 = vld [vmem:[%s248 + $0xa0] sm:$0xff]
                %271 = vst [vmem:[%s249 + $0x50] sm:$0xff] %v270
                %v272 = vld [vmem:[%s248 + $0xb0] sm:$0xff]
                %273 = vst [vmem:[%s249 + $0x58] sm:$0xff] %v272
                %v274 = vld [vmem:[%s248 + $0xc0] sm:$0xff]
                %275 = vst [vmem:[%s249 + $0x60] sm:$0xff] %v274
                %v276 = vld [vmem:[%s248 + $0xd0] sm:$0xff]
                %277 = vst [vmem:[%s249 + $0x68] sm:$0xff] %v276
                %v278 = vld [vmem:[%s248 + $0xe0] sm:$0xff]
                %279 = vst [vmem:[%s249 + $0x70] sm:$0xff] %v278
                %v280 = vld [vmem:[%s248 + $0xf0] sm:$0xff]
                %281 = vst [vmem:[%s249 + $0x78] sm:$0xff] %v280
              $region49: #{patchcore_forward.6} parent=43 // loop_footer
                %s247 = sadd.s32 1, %s243
              $region50: #{patchcore_forward.6} parent=43 // loop_footer_branch
                %242 = sbr.rel target = $region46
              $region51: #{patchcore_forward.6} parent=43 // loop_exit
                _
            $region44: #{patchcore_forward.6} parent=35 // pred_fallthru
              _
          $region36: #{patchcore_forward.6} parent=31 // pred_fallthru
            _
          %326 = vnop
        $region32: #{patchcore_forward.6} parent=23 // pred_fallthru
          _
      $region24: #{patchcore_forward.6} parent=5 // pred_fallthru
        _
      %p327 = scmp.le.s32.totalorder 1, %s12
      %p328 = scmp.lt.s32.totalorder %s12, 3
      %p329 = pnand %p327, %p328
      %p330 = pneg %p329
      // Predicated region
      $region67: #{patchcore_forward.6} parent=5 // pred_check
        _
      $region68: #{patchcore_forward.6} parent=5 // pred_check_branch
        %332 = sbr.rel (%p329) target = $region70
      $region69: #{patchcore_forward.6} parent=5 // pred_region
        %s333 = ssub.s32 %s12, 1
        %s334 = sand.u32 %s63, 1
        %s335 = sand.u32 %s63, 1
        %s336 = smul.addr %s335, 128
        %s337 = scalar_lea.vmem [#allocation4], %s336
        // Predicated region
        $region71: #{patchcore_forward.6} parent=69 // pred_check
          %p338 = pneg %p76
        $region72: #{patchcore_forward.6} parent=69 // pred_check_branch
          %340 = sbr.rel (%p338) target = $region74
        $region73: #{patchcore_forward.6} parent=69 // pred_region
          _
        $region74: #{patchcore_forward.6} parent=69 // pred_fallthru
          _
        %s341 = smul.u32 2, %s21
        %p342 = scmp.lt.s32.totalorder %s341, 3
        %s343 = scalar_select %p342, %s341, 3
        %s344 = scalar_lea.vmem %s0, %s343
        %p345 = pneg %p50
        %p346 = pneg %p47
        %s347 = sand.u32 %s63, 1
        %s348 = sand.u32 %s63, 1
        %s349 = smul.addr %s348, 128
        %s350 = scalar_lea.vmem [#allocation4], %s349
        %p351 = pneg %p76
        %p352 = pneg %p73
        %s353 = smul.u32 16, %s22
        %p354 = scmp.lt.s32.totalorder %s353, 15
        %s355 = scalar_select %p354, %s353, 15
        %s356 = smul.addr %s355, 4
        %s357 = scalar_lea.vmem %s2, %s356
        %p358 = pneg %p102
        %p359 = pneg %p99
        %s360 = smul.u32 16, %s22
        %p361 = scmp.lt.s32.totalorder %s360, 15
        %s362 = scalar_select %p361, %s360, 15
        %s363 = smul.addr %s362, 8
        %s364 = scalar_lea.vmem %s3, %s363
        %p365 = pneg %p128
        %p366 = pneg %p125
        %p367 = pneg %p154
        %p368 = pneg %p151
        %s369 = smul.u32 2, %s21
        %p370 = scmp.lt.s32.totalorder %s369, 3
        %s371 = scalar_select %p370, %s369, 3
        %s372 = scalar_lea.vmem %s4, %s371
        %p373 = pneg %p180
        %p374 = pneg %p177
        %s375 = smul.u32 2, %s21
        %p376 = scmp.lt.s32.totalorder %s375, 3
        %s377 = scalar_select %p376, %s375, 3
        %s378 = scalar_lea.vmem %s5, %s377
        %s379 = smul.u32 2, %s21
        %p380 = scmp.lt.s32.totalorder %s379, 3
        %s381 = scalar_select %p380, %s379, 3
        %s382 = scalar_lea.vmem %s0, %s381
        %s383 = smul.u32 2, %s21
        %s384 = smul.u32 2, %s21
        %s385 = smul.u32 16, %s22
        %p386 = scmp.lt.s32.totalorder %s385, 15
        %s387 = scalar_select %p386, %s385, 15
        %s388 = smul.addr %s387, 4
        %s389 = scalar_lea.vmem %s2, %s388
        %s390 = smul.u32 16, %s22
        %s391 = smul.u32 16, %s22
        %p392 = scmp.lt.s32.totalorder %s391, 15
        %s393 = scalar_select %p392, %s391, 15
        %s394 = smul.addr %s393, 8
        %s395 = scalar_lea.vmem %s3, %s394
        %s396 = smul.u32 16, %s22
        %s397 = smul.u32 2, %s21
        %p398 = scmp.lt.s32.totalorder %s397, 3
        %s399 = scalar_select %p398, %s397, 3
        %s400 = scalar_lea.vmem %s4, %s399
        %s401 = smul.u32 2, %s21
        %s402 = smul.u32 2, %s21
        %p403 = scmp.lt.s32.totalorder %s402, 3
        %s404 = scalar_select %p403, %s402, 3
        %s405 = scalar_lea.vmem %s5, %s404
        %s406 = smul.u32 2, %s21
        %p408 = scmp.eq.s32.totalorder %s22, 0
        // Predicated region
        $region75: #{patchcore_forward.6} parent=69 // pred_check
          %p409 = pneg %p408
        $region76: #{patchcore_forward.6} parent=69 // pred_check_branch
          %411 = sbr.rel (%p409) target = $region78
        $region77: #{patchcore_forward.6} parent=69 // pred_region
          %v412 = vlaneseq
          %vm413 = vcmp.ge.s32.totalorder %v412, 0
          %vm414 = vcmp.lt.s32.totalorder %v412, 256
          %vm415 = vmand %vm413, %vm414
          %416 = vst.msk [vmem:[#allocation2] sm:$0x3] %vm415, inf
          %417 = vst.msk [vmem:[#allocation3] sm:$0x3] %vm415, 0
        $region78: #{patchcore_forward.6} parent=69 // pred_fallthru
          _
        %v418 = vld [vmem:[%s389] sm:$0xf]
        %v419 = vld [vmem:[%s389 + $0x4] sm:$0xf]
        %v420 = vld [vmem:[%s389 + $0x8] sm:$0xf]
        %v421 = vld [vmem:[%s389 + $0xc] sm:$0xf]
        %v422 = vld [vmem:[%s389 + $0x10] sm:$0xf]
        %v423 = vld [vmem:[%s389 + $0x14] sm:$0xf]
        %v424 = vld [vmem:[%s389 + $0x18] sm:$0xf]
        %v425 = vld [vmem:[%s389 + $0x1c] sm:$0xf]
        %v426 = vld [vmem:[%s389 + $0x20] sm:$0xf]
        %v427 = vld [vmem:[%s389 + $0x24] sm:$0xf]
        %v428 = vld [vmem:[%s389 + $0x28] sm:$0xf]
        %v429 = vld [vmem:[%s389 + $0x2c] sm:$0xf]
        %v430 = vld [vmem:[%s389 + $0x30] sm:$0xf]
        %v431 = vld [vmem:[%s389 + $0x34] sm:$0xf]
        %v432 = vld [vmem:[%s389 + $0x38] sm:$0xf]
        %v433 = vld [vmem:[%s389 + $0x3c] sm:$0xf]
        %v434 = vld [vmem:[%s337] sm:$0xff]
        %v435 = vld [vmem:[%s337 + $0x8] sm:$0xff]
        %v436 = vld [vmem:[%s337 + $0x10] sm:$0xff]
        %v437 = vld [vmem:[%s337 + $0x18] sm:$0xff]
        %v438 = vld [vmem:[%s337 + $0x20] sm:$0xff]
        %v439 = vld [vmem:[%s337 + $0x28] sm:$0xff]
        %v440 = vld [vmem:[%s337 + $0x30] sm:$0xff]
        %v441 = vld [vmem:[%s337 + $0x38] sm:$0xff]
        %v442 = vld [vmem:[%s337 + $0x40] sm:$0xff]
        %v443 = vld [vmem:[%s337 + $0x48] sm:$0xff]
        %v444 = vld [vmem:[%s337 + $0x50] sm:$0xff]
        %v445 = vld [vmem:[%s337 + $0x58] sm:$0xff]
        %v446 = vld [vmem:[%s337 + $0x60] sm:$0xff]
        %v447 = vld [vmem:[%s337 + $0x68] sm:$0xff]
        %v448 = vld [vmem:[%s337 + $0x70] sm:$0xff]
        %v449 = vld [vmem:[%s337 + $0x78] sm:$0xff]
        %v466 = vunpack.c.l.b16 %v418
        %v467 = vunpack.c.l.b16 %v419
        %v468 = vunpack.c.l.b16 %v420
        %v469 = vunpack.c.l.b16 %v421
        %v470 = vunpack.c.l.b16 %v422
        %v471 = vunpack.c.l.b16 %v423
        %v472 = vunpack.c.l.b16 %v424
        %v473 = vunpack.c.l.b16 %v425
        %v474 = vunpack.c.l.b16 %v426
        %v475 = vunpack.c.l.b16 %v427
        %v476 = vunpack.c.l.b16 %v428
        %v477 = vunpack.c.l.b16 %v429
        %v478 = vunpack.c.l.b16 %v430
        %v479 = vunpack.c.l.b16 %v431
        %v480 = vunpack.c.l.b16 %v432
        %v481 = vunpack.c.l.b16 %v433
        %v482 = vpack.c.b16 %v467, %v466
        %v483 = vpack.c.b16 %v469, %v468
        %v484 = vpack.c.b16 %v471, %v470
        %v485 = vpack.c.b16 %v473, %v472
        %v486 = vpack.c.b16 %v475, %v474
        %v487 = vpack.c.b16 %v477, %v476
        %v488 = vpack.c.b16 %v479, %v478
        %v489 = vpack.c.b16 %v481, %v480
        %v514 = vunpack.c.l.b16 %v434
        %v515 = vunpack.c.h.b16 %v434
        %v516 = vunpack.c.l.b16 %v435
        %v517 = vunpack.c.h.b16 %v435
        %v518 = vunpack.c.l.b16 %v436
        %v519 = vunpack.c.h.b16 %v436
        %v520 = vunpack.c.l.b16 %v437
        %v521 = vunpack.c.h.b16 %v437
        %v522 = vunpack.c.l.b16 %v438
        %v523 = vunpack.c.h.b16 %v438
        %v524 = vunpack.c.l.b16 %v439
        %v525 = vunpack.c.h.b16 %v439
        %v526 = vunpack.c.l.b16 %v440
        %v527 = vunpack.c.h.b16 %v440
        %v528 = vunpack.c.l.b16 %v441
        %v529 = vunpack.c.h.b16 %v441
        %v530 = vunpack.c.l.b16 %v442
        %v531 = vunpack.c.h.b16 %v442
        %v532 = vunpack.c.l.b16 %v443
        %v533 = vunpack.c.h.b16 %v443
        %v534 = vunpack.c.l.b16 %v444
        %v535 = vunpack.c.h.b16 %v444
        %v536 = vunpack.c.l.b16 %v445
        %v537 = vunpack.c.h.b16 %v445
        %v538 = vunpack.c.l.b16 %v446
        %v539 = vunpack.c.h.b16 %v446
        %v540 = vunpack.c.l.b16 %v447
        %v541 = vunpack.c.h.b16 %v447
        %v542 = vunpack.c.l.b16 %v448
        %v543 = vunpack.c.h.b16 %v448
        %v544 = vunpack.c.l.b16 %v449
        %v545 = vunpack.c.h.b16 %v449
        %v546 = vpack.c.b16 %v516, %v514
        %v547 = vpack.c.b16 %v517, %v515
        %v548 = vpack.c.b16 %v520, %v518
        %v549 = vpack.c.b16 %v521, %v519
        %v550 = vpack.c.b16 %v524, %v522
        %v551 = vpack.c.b16 %v525, %v523
        %v552 = vpack.c.b16 %v528, %v526
        %v553 = vpack.c.b16 %v529, %v527
        %v554 = vpack.c.b16 %v532, %v530
        %v555 = vpack.c.b16 %v533, %v531
        %v556 = vpack.c.b16 %v536, %v534
        %v557 = vpack.c.b16 %v537, %v535
        %v558 = vpack.c.b16 %v540, %v538
        %v559 = vpack.c.b16 %v541, %v539
        %v560 = vpack.c.b16 %v544, %v542
        %v561 = vpack.c.b16 %v545, %v543
        %578 = vmatprep.subr.bf16.mxu0 %v547
        %579 = vmatpush1.bf16.msra.mxu0 %v546
        %580 = vmatprep.subr.bf16.mxu0 %v549
        %581 = vmatpush1.bf16.msra.mxu0 %v548
        %582 = vmatprep.subr.bf16.mxu0 %v551
        %583 = vmatpush1.bf16.msra.mxu0 %v550
        %584 = vmatprep.subr.bf16.mxu0 %v553
        %585 = vmatpush1.bf16.msra.mxu0 %v552
        %586 = vmatprep.subr.bf16.mxu0 %v555
        %587 = vmatpush1.bf16.msra.mxu0 %v554
        %588 = vmatprep.subr.bf16.mxu0 %v557
        %589 = vmatpush1.bf16.msra.mxu0 %v556
        %590 = vmatprep.subr.bf16.mxu0 %v559
        %591 = vmatpush1.bf16.msra.mxu0 %v558
        %592 = vmatprep.subr.bf16.mxu0 %v561
        %593 = vmatpush1.bf16.msra.mxu0 %v560
        %594 = vmatprep.subr.bf16.mxu0 0
        %595 = vmatpush1.bf16.msra.mxu0 0
        %596 = vmatprep.subr.bf16.mxu0 0
        %597 = vmatpush1.bf16.msra.mxu0 0
        %598 = vmatprep.subr.bf16.mxu0 0
        %599 = vmatpush1.bf16.msra.mxu0 0
        %600 = vmatprep.subr.bf16.mxu0 0
        %601 = vmatpush1.bf16.msra.mxu0 0
        %602 = vmatprep.subr.bf16.mxu0 0
        %603 = vmatpush1.bf16.msra.mxu0 0
        %604 = vmatprep.subr.bf16.mxu0 0
        %605 = vmatpush1.bf16.msra.mxu0 0
        %606 = vmatprep.subr.bf16.mxu0 0
        %607 = vmatpush1.bf16.msra.mxu0 0
        %608 = vmatprep.subr.bf16.mxu0 0
        %609 = vmatpush1.bf16.msra.mxu0 0
        %610 = vmatprep.mubr.bf16.mxu0 0
        %611 = vmatmul.mubr.bf16.gmra.mrb[0].mxu0 %v482
        %v612 = vpop.f32.mrb[0].mxu0
        %v613 = vadd.f32 0.0, %v612
        %v614 = vpop.f32.mrb[0].mxu0
        %v615 = vadd.f32 0.0, %v614
        %v616 = vpop.f32.mrb[0].mxu0
        %v617 = vadd.f32 0.0, %v616
        %v618 = vpop.f32.mrb[0].mxu0
        %v619 = vadd.f32 0.0, %v618
        %620 = vmatprep.mubr.bf16.mxu0 0
        %621 = vmatmul.mubr.bf16.gmra.mrb[0].mxu0 %v483
        %v622 = vpop.f32.mrb[0].mxu0
        %v623 = vadd.f32 0.0, %v622
        %v624 = vpop.f32.mrb[0].mxu0
        %v625 = vadd.f32 0.0, %v624
        %v626 = vpop.f32.mrb[0].mxu0
        %v627 = vadd.f32 0.0, %v626
        %v628 = vpop.f32.mrb[0].mxu0
        %v629 = vadd.f32 0.0, %v628
        %630 = vmatprep.mubr.bf16.mxu0 0
        %631 = vmatmul.mubr.bf16.gmra.mrb[0].mxu0 %v484
        %v632 = vpop.f32.mrb[0].mxu0
        %v633 = vadd.f32 0.0, %v632
        %v634 = vpop.f32.mrb[0].mxu0
        %v635 = vadd.f32 0.0, %v634
        %v636 = vpop.f32.mrb[0].mxu0
        %v637 = vadd.f32 0.0, %v636
        %v638 = vpop.f32.mrb[0].mxu0
        %v639 = vadd.f32 0.0, %v638
        %640 = vmatprep.mubr.bf16.mxu0 0
        %641 = vmatmul.mubr.bf16.gmra.mrb[0].mxu0 %v485
        %v642 = vpop.f32.mrb[0].mxu0
        %v643 = vadd.f32 0.0, %v642
        %v644 = vpop.f32.mrb[0].mxu0
        %v645 = vadd.f32 0.0, %v644
        %v646 = vpop.f32.mrb[0].mxu0
        %v647 = vadd.f32 0.0, %v646
        %v648 = vpop.f32.mrb[0].mxu0
        %v649 = vadd.f32 0.0, %v648
        %650 = vmatprep.mubr.bf16.mxu0 0
        %651 = vmatmul.mubr.bf16.gmra.mrb[0].mxu0 %v486
        %v652 = vpop.f32.mrb[0].mxu0
        %v653 = vadd.f32 0.0, %v652
        %v654 = vpop.f32.mrb[0].mxu0
        %v655 = vadd.f32 0.0, %v654
        %v656 = vpop.f32.mrb[0].mxu0
        %v657 = vadd.f32 0.0, %v656
        %v658 = vpop.f32.mrb[0].mxu0
        %v659 = vadd.f32 0.0, %v658
        %660 = vmatprep.mubr.bf16.mxu0 0
        %661 = vmatmul.mubr.bf16.gmra.mrb[0].mxu0 %v487
        %v662 = vpop.f32.mrb[0].mxu0
        %v663 = vadd.f32 0.0, %v662
        %v664 = vpop.f32.mrb[0].mxu0
        %v665 = vadd.f32 0.0, %v664
        %v666 = vpop.f32.mrb[0].mxu0
        %v667 = vadd.f32 0.0, %v666
        %v668 = vpop.f32.mrb[0].mxu0
        %v669 = vadd.f32 0.0, %v668
        %670 = vmatprep.mubr.bf16.mxu0 0
        %671 = vmatmul.mubr.bf16.gmra.mrb[0].mxu0 %v488
        %v672 = vpop.f32.mrb[0].mxu0
        %v673 = vadd.f32 0.0, %v672
        %v674 = vpop.f32.mrb[0].mxu0
        %v675 = vadd.f32 0.0, %v674
        %v676 = vpop.f32.mrb[0].mxu0
        %v677 = vadd.f32 0.0, %v676
        %v678 = vpop.f32.mrb[0].mxu0
        %v679 = vadd.f32 0.0, %v678
        %680 = vmatprep.mubr.bf16.mxu0 0
        %681 = vmatmul.mubr.bf16.gmra.mrb[0].mxu0 %v489
        %v682 = vpop.f32.mrb[0].mxu0
        %v683 = vadd.f32 0.0, %v682
        %v684 = vpop.f32.mrb[0].mxu0
        %v685 = vadd.f32 0.0, %v684
        %v686 = vpop.f32.mrb[0].mxu0
        %v687 = vadd.f32 0.0, %v686
        %v688 = vpop.f32.mrb[0].mxu0
        %v689 = vadd.f32 0.0, %v688
        %690 = vdwg.mxu0
        %v691 = vld [vmem:[%s395] sm:$0xff]
        %v692 = vld [vmem:[%s395 + $0x8] sm:$0xff]
        %v693 = vld [vmem:[%s395 + $0x10] sm:$0xff]
        %v694 = vld [vmem:[%s395 + $0x18] sm:$0xff]
        %v695 = vld [vmem:[%s395 + $0x20] sm:$0xff]
        %v696 = vld [vmem:[%s395 + $0x28] sm:$0xff]
        %v697 = vld [vmem:[%s395 + $0x30] sm:$0xff]
        %v698 = vld [vmem:[%s395 + $0x38] sm:$0xff]
        %v699 = vld [vmem:[%s395 + $0x40] sm:$0xff]
        %v700 = vld [vmem:[%s395 + $0x48] sm:$0xff]
        %v701 = vld [vmem:[%s395 + $0x50] sm:$0xff]
        %v702 = vld [vmem:[%s395 + $0x58] sm:$0xff]
        %v703 = vld [vmem:[%s395 + $0x60] sm:$0xff]
        %v704 = vld [vmem:[%s395 + $0x68] sm:$0xff]
        %v705 = vld [vmem:[%s395 + $0x70] sm:$0xff]
        %v706 = vld [vmem:[%s395 + $0x78] sm:$0xff]
        %v707 = vmul.f32 %v613, 2.0
        %v708 = vmul.f32 %v615, 2.0
        %v709 = vmul.f32 %v617, 2.0
        %v710 = vmul.f32 %v619, 2.0
        %v711 = vmul.f32 %v623, 2.0
        %v712 = vmul.f32 %v625, 2.0
        %v713 = vmul.f32 %v627, 2.0
        %v714 = vmul.f32 %v629, 2.0
        %v715 = vmul.f32 %v633, 2.0
        %v716 = vmul.f32 %v635, 2.0
        %v717 = vmul.f32 %v637, 2.0
        %v718 = vmul.f32 %v639, 2.0
        %v719 = vmul.f32 %v643, 2.0
        %v720 = vmul.f32 %v645, 2.0
        %v721 = vmul.f32 %v647, 2.0
        %v722 = vmul.f32 %v649, 2.0
        %v723 = vmul.f32 %v653, 2.0
        %v724 = vmul.f32 %v655, 2.0
        %v725 = vmul.f32 %v657, 2.0
        %v726 = vmul.f32 %v659, 2.0
        %v727 = vmul.f32 %v663, 2.0
        %v728 = vmul.f32 %v665, 2.0
        %v729 = vmul.f32 %v667, 2.0
        %v730 = vmul.f32 %v669, 2.0
        %v731 = vmul.f32 %v673, 2.0
        %v732 = vmul.f32 %v675, 2.0
        %v733 = vmul.f32 %v677, 2.0
        %v734 = vmul.f32 %v679, 2.0
        %v735 = vmul.f32 %v683, 2.0
        %v736 = vmul.f32 %v685, 2.0
        %v737 = vmul.f32 %v687, 2.0
        %v738 = vmul.f32 %v689, 2.0
        %740 = vset.pattern.permute.xlu0 0
        %741 = vperm.xlu0 %740, %v691
        %v742 = vpop.permute.xlu0 %741
        %745 = vset.pattern.permute.xlu0 0
        %746 = vperm.xlu0 %745, %v692
        %v747 = vpop.permute.xlu0 %746
        %750 = vset.pattern.permute.xlu0 0
        %751 = vperm.xlu0 %750, %v693
        %v752 = vpop.permute.xlu0 %751
        %755 = vset.pattern.permute.xlu0 0
        %756 = vperm.xlu0 %755, %v694
        %v757 = vpop.permute.xlu0 %756
        %760 = vset.pattern.permute.xlu0 0
        %761 = vperm.xlu0 %760, %v695
        %v762 = vpop.permute.xlu0 %761
        %765 = vset.pattern.permute.xlu0 0
        %766 = vperm.xlu0 %765, %v696
        %v767 = vpop.permute.xlu0 %766
        %770 = vset.pattern.permute.xlu0 0
        %771 = vperm.xlu0 %770, %v697
        %v772 = vpop.permute.xlu0 %771
        %775 = vset.pattern.permute.xlu0 0
        %776 = vperm.xlu0 %775, %v698
        %v777 = vpop.permute.xlu0 %776
        %780 = vset.pattern.permute.xlu0 0
        %781 = vperm.xlu0 %780, %v699
        %v782 = vpop.permute.xlu0 %781
        %785 = vset.pattern.permute.xlu0 0
        %786 = vperm.xlu0 %785, %v700
        %v787 = vpop.permute.xlu0 %786
        %790 = vset.pattern.permute.xlu0 0
        %791 = vperm.xlu0 %790, %v701
        %v792 = vpop.permute.xlu0 %791
        %795 = vset.pattern.permute.xlu0 0
        %796 = vperm.xlu0 %795, %v702
        %v797 = vpop.permute.xlu0 %796
        %800 = vset.pattern.permute.xlu0 0
        %801 = vperm.xlu0 %800, %v703
        %v802 = vpop.permute.xlu0 %801
        %805 = vset.pattern.permute.xlu0 0
        %806 = vperm.xlu0 %805, %v704
        %v807 = vpop.permute.xlu0 %806
        %810 = vset.pattern.permute.xlu0 0
        %811 = vperm.xlu0 %810, %v705
        %v812 = vpop.permute.xlu0 %811
        %815 = vset.pattern.permute.xlu0 0
        %816 = vperm.xlu0 %815, %v706
        %v817 = vpop.permute.xlu0 %816
        %v819 = vsub.f32 %v742, %v707
        %v820 = vsub.f32 %v742, %v708
        %v821 = vsub.f32 %v747, %v709
        %v822 = vsub.f32 %v747, %v710
        %v823 = vsub.f32 %v752, %v711
        %v824 = vsub.f32 %v752, %v712
        %v825 = vsub.f32 %v757, %v713
        %v826 = vsub.f32 %v757, %v714
        %v827 = vsub.f32 %v762, %v715
        %v828 = vsub.f32 %v762, %v716
        %v829 = vsub.f32 %v767, %v717
        %v830 = vsub.f32 %v767, %v718
        %v831 = vsub.f32 %v772, %v719
        %v832 = vsub.f32 %v772, %v720
        %v833 = vsub.f32 %v777, %v721
        %v834 = vsub.f32 %v777, %v722
        %v835 = vsub.f32 %v782, %v723
        %v836 = vsub.f32 %v782, %v724
        %v837 = vsub.f32 %v787, %v725
        %v838 = vsub.f32 %v787, %v726
        %v839 = vsub.f32 %v792, %v727
        %v840 = vsub.f32 %v792, %v728
        %v841 = vsub.f32 %v797, %v729
        %v842 = vsub.f32 %v797, %v730
        %v843 = vsub.f32 %v802, %v731
        %v844 = vsub.f32 %v802, %v732
        %v845 = vsub.f32 %v807, %v733
        %v846 = vsub.f32 %v807, %v734
        %v847 = vsub.f32 %v812, %v735
        %v848 = vsub.f32 %v812, %v736
        %v849 = vsub.f32 %v817, %v737
        %v850 = vsub.f32 %v817, %v738
        %v851 = vmin.f32 %v819, %v823
        %v852 = vmin.f32 %v821, %v825
        %v853 = vmin.f32 %v851, %v827
        %v854 = vmin.f32 %v852, %v829
        %v855 = vmin.f32 %v853, %v831
        %v856 = vmin.f32 %v854, %v833
        %v857 = vmin.f32 %v855, %v835
        %v858 = vmin.f32 %v856, %v837
        %v859 = vmin.f32 %v857, %v839
        %v860 = vmin.f32 %v858, %v841
        %v861 = vmin.f32 %v859, %v843
        %v862 = vmin.f32 %v860, %v845
        %v863 = vmin.f32 %v861, %v847
        %v864 = vmin.f32 %v862, %v849
        %v865 = vmin.f32 %v863, %v864
        %v866 = vrot.slane %v865, 4
        %v867 = vmin.f32 %v865, %v866
        %v868 = vrot.slane %v867, 2
        %v869 = vmin.f32 %v867, %v868
        %v870 = vrot.slane %v869, 1
        %v871 = vmin.f32 %v869, %v870
        %v872 = vmin.f32 %v820, %v824
        %v873 = vmin.f32 %v822, %v826
        %v874 = vmin.f32 %v872, %v828
        %v875 = vmin.f32 %v873, %v830
        %v876 = vmin.f32 %v874, %v832
        %v877 = vmin.f32 %v875, %v834
        %v878 = vmin.f32 %v876, %v836
        %v879 = vmin.f32 %v877, %v838
        %v880 = vmin.f32 %v878, %v840
        %v881 = vmin.f32 %v879, %v842
        %v882 = vmin.f32 %v880, %v844
        %v883 = vmin.f32 %v881, %v846
        %v884 = vmin.f32 %v882, %v848
        %v885 = vmin.f32 %v883, %v850
        %v886 = vmin.f32 %v884, %v885
        %v887 = vrot.slane %v886, 4
        %v888 = vmin.f32 %v886, %v887
        %v889 = vrot.slane %v888, 2
        %v890 = vmin.f32 %v888, %v889
        %v891 = vrot.slane %v890, 1
        %v892 = vmin.f32 %v890, %v891
        %v893 = vlaneseq
        %v894 = vshrl.u32 %v893, 7
        %v895 = vadd.s32 %v894, 8
        %v896 = vadd.s32 %v894, 16
        %v897 = vadd.s32 %v894, 24
        %v898 = vadd.s32 %v894, 32
        %v899 = vadd.s32 %v894, 40
        %v900 = vadd.s32 %v894, 48
        %v901 = vadd.s32 %v894, 56
        %v902 = vadd.s32 %v894, 64
        %v903 = vadd.s32 %v894, 72
        %v904 = vadd.s32 %v894, 80
        %v905 = vadd.s32 %v894, 88
        %v906 = vadd.s32 %v894, 96
        %v907 = vadd.s32 %v894, 104
        %v908 = vadd.s32 %v894, 112
        %v909 = vadd.s32 %v894, 120
        %vm910 = vcmp.le.f32.partialorder %v819, %v871
        %vm911 = vcmp.le.f32.partialorder %v820, %v892
        %vm912 = vcmp.le.f32.partialorder %v821, %v871
        %vm913 = vcmp.le.f32.partialorder %v822, %v892
        %vm914 = vcmp.le.f32.partialorder %v823, %v871
        %vm915 = vcmp.le.f32.partialorder %v824, %v892
        %vm916 = vcmp.le.f32.partialorder %v825, %v871
        %vm917 = vcmp.le.f32.partialorder %v826, %v892
        %vm918 = vcmp.le.f32.partialorder %v827, %v871
        %vm919 = vcmp.le.f32.partialorder %v828, %v892
        %vm920 = vcmp.le.f32.partialorder %v829, %v871
        %vm921 = vcmp.le.f32.partialorder %v830, %v892
        %vm922 = vcmp.le.f32.partialorder %v831, %v871
        %vm923 = vcmp.le.f32.partialorder %v832, %v892
        %vm924 = vcmp.le.f32.partialorder %v833, %v871
        %vm925 = vcmp.le.f32.partialorder %v834, %v892
        %vm926 = vcmp.le.f32.partialorder %v835, %v871
        %vm927 = vcmp.le.f32.partialorder %v836, %v892
        %vm928 = vcmp.le.f32.partialorder %v837, %v871
        %vm929 = vcmp.le.f32.partialorder %v838, %v892
        %vm930 = vcmp.le.f32.partialorder %v839, %v871
        %vm931 = vcmp.le.f32.partialorder %v840, %v892
        %vm932 = vcmp.le.f32.partialorder %v841, %v871
        %vm933 = vcmp.le.f32.partialorder %v842, %v892
        %vm934 = vcmp.le.f32.partialorder %v843, %v871
        %vm935 = vcmp.le.f32.partialorder %v844, %v892
        %vm936 = vcmp.le.f32.partialorder %v845, %v871
        %vm937 = vcmp.le.f32.partialorder %v846, %v892
        %vm938 = vcmp.le.f32.partialorder %v847, %v871
        %vm939 = vcmp.le.f32.partialorder %v848, %v892
        %vm940 = vcmp.le.f32.partialorder %v849, %v871
        %vm941 = vcmp.le.f32.partialorder %v850, %v892
        %v942 = vsel %vm910, %v894, 2147483647
        %v943 = vsel %vm911, %v894, 2147483647
        %v944 = vsel %vm912, %v895, 2147483647
        %v945 = vsel %vm913, %v895, 2147483647
        %v946 = vsel %vm914, %v896, 2147483647
        %v947 = vsel %vm915, %v896, 2147483647
        %v948 = vsel %vm916, %v897, 2147483647
        %v949 = vsel %vm917, %v897, 2147483647
        %v950 = vsel %vm918, %v898, 2147483647
        %v951 = vsel %vm919, %v898, 2147483647
        %v952 = vsel %vm920, %v899, 2147483647
        %v953 = vsel %vm921, %v899, 2147483647
        %v954 = vsel %vm922, %v900, 2147483647
        %v955 = vsel %vm923, %v900, 2147483647
        %v956 = vsel %vm924, %v901, 2147483647
        %v957 = vsel %vm925, %v901, 2147483647
        %v958 = vsel %vm926, %v902, 2147483647
        %v959 = vsel %vm927, %v902, 2147483647
        %v960 = vsel %vm928, %v903, 2147483647
        %v961 = vsel %vm929, %v903, 2147483647
        %v962 = vsel %vm930, %v904, 2147483647
        %v963 = vsel %vm931, %v904, 2147483647
        %v964 = vsel %vm932, %v905, 2147483647
        %v965 = vsel %vm933, %v905, 2147483647
        %v966 = vsel %vm934, %v906, 2147483647
        %v967 = vsel %vm935, %v906, 2147483647
        %v968 = vsel %vm936, %v907, 2147483647
        %v969 = vsel %vm937, %v907, 2147483647
        %v970 = vsel %vm938, %v908, 2147483647
        %v971 = vsel %vm939, %v908, 2147483647
        %v972 = vsel %vm940, %v909, 2147483647
        %v973 = vsel %vm941, %v909, 2147483647
        %vm974 = vcmp.lt.s32.totalorder %v942, %v946
        %v975 = vsel %vm974, %v942, %v946
        %vm976 = vcmp.lt.s32.totalorder %v944, %v948
        %v977 = vsel %vm976, %v944, %v948
        %vm978 = vcmp.lt.s32.totalorder %v975, %v950
        %v979 = vsel %vm978, %v975, %v950
        %vm980 = vcmp.lt.s32.totalorder %v977, %v952
        %v981 = vsel %vm980, %v977, %v952
        %vm982 = vcmp.lt.s32.totalorder %v979, %v954
        %v983 = vsel %vm982, %v979, %v954
        %vm984 = vcmp.lt.s32.totalorder %v981, %v956
        %v985 = vsel %vm984, %v981, %v956
        %vm986 = vcmp.lt.s32.totalorder %v983, %v958
        %v987 = vsel %vm986, %v983, %v958
        %vm988 = vcmp.lt.s32.totalorder %v985, %v960
        %v989 = vsel %vm988, %v985, %v960
        %vm990 = vcmp.lt.s32.totalorder %v987, %v962
        %v991 = vsel %vm990, %v987, %v962
        %vm992 = vcmp.lt.s32.totalorder %v989, %v964
        %v993 = vsel %vm992, %v989, %v964
        %vm994 = vcmp.lt.s32.totalorder %v991, %v966
        %v995 = vsel %vm994, %v991, %v966
        %vm996 = vcmp.lt.s32.totalorder %v993, %v968
        %v997 = vsel %vm996, %v993, %v968
        %vm998 = vcmp.lt.s32.totalorder %v995, %v970
        %v999 = vsel %vm998, %v995, %v970
        %vm1000 = vcmp.lt.s32.totalorder %v997, %v972
        %v1001 = vsel %vm1000, %v997, %v972
        %vm1002 = vcmp.lt.s32.totalorder %v999, %v1001
        %v1003 = vsel %vm1002, %v999, %v1001
        %v1004 = vrot.slane %v1003, 4
        %vm1005 = vcmp.lt.s32.totalorder %v1003, %v1004
        %v1006 = vsel %vm1005, %v1003, %v1004
        %v1007 = vrot.slane %v1006, 2
        %vm1008 = vcmp.lt.s32.totalorder %v1006, %v1007
        %v1009 = vsel %vm1008, %v1006, %v1007
        %v1010 = vrot.slane %v1009, 1
        %vm1011 = vcmp.lt.s32.totalorder %v1009, %v1010
        %v1012 = vsel %vm1011, %v1009, %v1010
        %vm1013 = vcmp.lt.s32.totalorder %v943, %v947
        %v1014 = vsel %vm1013, %v943, %v947
        %vm1015 = vcmp.lt.s32.totalorder %v945, %v949
        %v1016 = vsel %vm1015, %v945, %v949
        %vm1017 = vcmp.lt.s32.totalorder %v1014, %v951
        %v1018 = vsel %vm1017, %v1014, %v951
        %vm1019 = vcmp.lt.s32.totalorder %v1016, %v953
        %v1020 = vsel %vm1019, %v1016, %v953
        %vm1021 = vcmp.lt.s32.totalorder %v1018, %v955
        %v1022 = vsel %vm1021, %v1018, %v955
        %vm1023 = vcmp.lt.s32.totalorder %v1020, %v957
        %v1024 = vsel %vm1023, %v1020, %v957
        %vm1025 = vcmp.lt.s32.totalorder %v1022, %v959
        %v1026 = vsel %vm1025, %v1022, %v959
        %vm1027 = vcmp.lt.s32.totalorder %v1024, %v961
        %v1028 = vsel %vm1027, %v1024, %v961
        %vm1029 = vcmp.lt.s32.totalorder %v1026, %v963
        %v1030 = vsel %vm1029, %v1026, %v963
        %vm1031 = vcmp.lt.s32.totalorder %v1028, %v965
        %v1032 = vsel %vm1031, %v1028, %v965
        %vm1033 = vcmp.lt.s32.totalorder %v1030, %v967
        %v1034 = vsel %vm1033, %v1030, %v967
        %vm1035 = vcmp.lt.s32.totalorder %v1032, %v969
        %v1036 = vsel %vm1035, %v1032, %v969
        %vm1037 = vcmp.lt.s32.totalorder %v1034, %v971
        %v1038 = vsel %vm1037, %v1034, %v971
        %vm1039 = vcmp.lt.s32.totalorder %v1036, %v973
        %v1040 = vsel %vm1039, %v1036, %v973
        %vm1041 = vcmp.lt.s32.totalorder %v1038, %v1040
        %v1042 = vsel %vm1041, %v1038, %v1040
        %v1043 = vrot.slane %v1042, 4
        %vm1044 = vcmp.lt.s32.totalorder %v1042, %v1043
        %v1045 = vsel %vm1044, %v1042, %v1043
        %v1046 = vrot.slane %v1045, 2
        %vm1047 = vcmp.lt.s32.totalorder %v1045, %v1046
        %v1048 = vsel %vm1047, %v1045, %v1046
        %v1049 = vrot.slane %v1048, 1
        %vm1050 = vcmp.lt.s32.totalorder %v1048, %v1049
        %v1051 = vsel %vm1050, %v1048, %v1049
        %s1052 = smul.u32 %s22, 128
        %v1053 = vstv %s1052
        %v1054 = vadd.s32 %v1012, %v1053
        %v1055 = vadd.s32 %v1051, %v1053
        %v1056 = vld [vmem:[#allocation2] sm:$0x3]
        %v1058 = vlaneseq
        %v1059 = vshrl.u32 %v1058, 7
        %v1060 = vsub.s32 0, %v1059
        %v1061 = vrot.slane %v1056, %v1060
        %v1062 = vlaneseq
        %v1063 = vshrl.u32 %v1062, 7
        %v1064 = vsub.s32 1, %v1063
        %v1065 = vrot.slane %v1056, %v1064
        %vm1068 = vcmp.lt.f32.partialorder %v871, %v1061
        %vm1069 = vcmp.lt.f32.partialorder %v892, %v1065
        %v1070 = vld [vmem:[#allocation3] sm:$0x3]
        %v1071 = vlaneseq
        %v1072 = vshrl.u32 %v1071, 7
        %v1073 = vsub.s32 0, %v1072
        %v1074 = vrot.slane %v1070, %v1073
        %v1075 = vlaneseq
        %v1076 = vshrl.u32 %v1075, 7
        %v1077 = vsub.s32 1, %v1076
        %v1078 = vrot.slane %v1070, %v1077
        %v1079 = vsel %vm1068, %v1054, %v1074
        %v1080 = vsel %vm1069, %v1055, %v1078
        %v1081 = vcombine.low %v1079, %v1080
        %v1083 = vunpack.c.l.s4 1966171168
        %v1084 = vunpack.c.0.s8 %v1083
        %v1085 = vlaneseq
        %v1086 = vshrl.u32 %v1085, 7
        %v1087 = vsub.s32 %v1084, %v1086
        %v1088 = vrot.slane %v1081, %v1087
        %v1090 = vunpack.c.l.s4 1966171168
        %v1091 = vunpack.c.0.s8 %v1090
        %v1092 = vlaneseq
        %v1093 = vshrl.u32 %v1092, 7
        %v1094 = vsub.s32 %v1091, %v1093
        %v1095 = vrot.slane %v1088, %v1094
        %v1096 = vlaneseq
        %vm1097 = vcmp.ge.s32.totalorder %v1096, 0
        %vm1098 = vcmp.lt.s32.totalorder %v1096, 256
        %vm1099 = vmand %vm1097, %vm1098
        %1100 = vst.msk [vmem:[#allocation3] sm:$0x3] %vm1099, %v1095
        %v1101 = vld [vmem:[#allocation2] sm:$0x3]
        %v1103 = vlaneseq
        %v1104 = vshrl.u32 %v1103, 7
        %v1105 = vsub.s32 0, %v1104
        %v1106 = vrot.slane %v1101, %v1105
        %v1107 = vlaneseq
        %v1108 = vshrl.u32 %v1107, 7
        %v1109 = vsub.s32 1, %v1108
        %v1110 = vrot.slane %v1101, %v1109
        %v1113 = vsel %vm1068, %v871, %v1106
        %v1114 = vsel %vm1069, %v892, %v1110
        %v1117 = vcombine.low %v1113, %v1114
        %v1119 = vunpack.c.l.s4 1966171168
        %v1120 = vunpack.c.0.s8 %v1119
        %v1121 = vlaneseq
        %v1122 = vshrl.u32 %v1121, 7
        %v1123 = vsub.s32 %v1120, %v1122
        %v1124 = vrot.slane %v1117, %v1123
        %v1126 = vunpack.c.l.s4 1966171168
        %v1127 = vunpack.c.0.s8 %v1126
        %v1128 = vlaneseq
        %v1129 = vshrl.u32 %v1128, 7
        %v1130 = vsub.s32 %v1127, %v1129
        %v1131 = vrot.slane %v1124, %v1130
        %1133 = vst.msk [vmem:[#allocation2] sm:$0x3] %vm1099, %v1131
        // Predicated region
        $region79: #{patchcore_forward.6} parent=69 // pred_check
          %p1134 = pneg %p408
        $region80: #{patchcore_forward.6} parent=69 // pred_check_branch
          %1136 = sbr.rel (%p1134) target = $region82
        $region81: #{patchcore_forward.6} parent=69 // pred_region
          %v1137 = vld [vmem:[%s382] sm:$0x3]
          %v1138 = vld [vmem:[#allocation2] sm:$0x3]
          %v1139 = vadd.f32 %v1137, %v1138
          %v1140 = vmax.f32 %v1139, 0.0
          %v1141 = vrsqrt.pop %v1140
          %v1142 = vmul.f32 %v1140, %v1141
          %vm1143 = vcmp.eq.f32.partialorder %v1140, inf
          %v1144 = vsel %vm1143, %v1140, %v1142
          %vm1145 = vcmp.eq.f32.partialorder %v1140, 0.0
          %v1146 = vand.u32 %v1140, 2147483648
          %v1147 = vsel %vm1145, %v1146, %v1144
          %1148 = vst.msk [vmem:[%s400] sm:$0x3] %vm1099, %v1147
          %v1149 = vld [vmem:[#allocation3] sm:$0x3]
          %1150 = vst.msk [vmem:[%s405] sm:$0x3] %vm1099, %v1149
        $region82: #{patchcore_forward.6} parent=69 // pred_fallthru
          _
        %s1151 = smul.u32 2, %s21
        %p1152 = scmp.lt.s32.totalorder %s1151, 3
        %s1153 = scalar_select %p1152, %s1151, 3
        %s1154 = scalar_lea.vmem %s4, %s1153
        %s1155 = smul.u32 2, %s21
        %p1156 = scmp.lt.s32.totalorder %s1155, 3
        %s1157 = scalar_select %p1156, %s1155, 3
        %s1158 = scalar_lea.vmem %s5, %s1157
        // Predicated region
        $region83: #{patchcore_forward.6} parent=69 // pred_check
          %p1159 = pneg %p151
        $region84: #{patchcore_forward.6} parent=69 // pred_check_branch
          %1161 = sbr.rel (%p1159) target = $region86
        $region85: #{patchcore_forward.6} parent=69 // pred_region
          %s1162 = smul.u32 2, %s21
        $region86: #{patchcore_forward.6} parent=69 // pred_fallthru
          _
        // Predicated region
        $region87: #{patchcore_forward.6} parent=69 // pred_check
          %p1163 = pneg %p177
        $region88: #{patchcore_forward.6} parent=69 // pred_check_branch
          %1165 = sbr.rel (%p1163) target = $region90
        $region89: #{patchcore_forward.6} parent=69 // pred_region
          %s1166 = smul.u32 2, %s21
        $region90: #{patchcore_forward.6} parent=69 // pred_fallthru
          _
      $region70: #{patchcore_forward.6} parent=5 // pred_fallthru
        _
      %p1167 = scmp.le.s32.totalorder 2, %s12
      // Predicated region
      $region91: #{patchcore_forward.6} parent=5 // pred_check
        %p1168 = pneg %p1167
      $region92: #{patchcore_forward.6} parent=5 // pred_check_branch
        %1170 = sbr.rel (%p1168) target = $region94
      $region93: #{patchcore_forward.6} parent=5 // pred_region
        %s1171 = ssub.s32 %s12, 2
        // Predicated region
        $region95: #{patchcore_forward.6} parent=93 // pred_check
          %p1172 = pneg %p157
        $region96: #{patchcore_forward.6} parent=93 // pred_check_branch
          %1174 = sbr.rel (%p1172) target = $region98
        $region97: #{patchcore_forward.6} parent=93 // pred_region
          %s1175 = smul.u32 2, %s23
          %p1176 = scmp.lt.s32.totalorder %s1175, 3
          %s1177 = scalar_select %p1176, %s1175, 3
          %s1178 = scalar_lea.vmem %s4, %s1177
        $region98: #{patchcore_forward.6} parent=93 // pred_fallthru
          _
        // Predicated region
        $region99: #{patchcore_forward.6} parent=93 // pred_check
          %p1179 = pneg %p183
        $region100: #{patchcore_forward.6} parent=93 // pred_check_branch
          %1181 = sbr.rel (%p1179) target = $region102
        $region101: #{patchcore_forward.6} parent=93 // pred_region
          %s1182 = smul.u32 2, %s23
          %p1183 = scmp.lt.s32.totalorder %s1182, 3
          %s1184 = scalar_select %p1183, %s1182, 3
          %s1185 = scalar_lea.vmem %s5, %s1184
        $region102: #{patchcore_forward.6} parent=93 // pred_fallthru
          _
      $region94: #{patchcore_forward.6} parent=5 // pred_fallthru
        _
    $region6: #{patchcore_forward.6} parent=1 // loop_footer
      %s16 = sadd.s32 1, %s12
    $region7: #{patchcore_forward.6} parent=1 // loop_footer_branch
      %11 = sbr.rel target = $region3
    $region8: #{patchcore_forward.6} parent=1 // loop_exit
      _

// kernel: patchcore_forward.7
$region0: #{patchcore_forward.7}
  #allocation0 [shape = 'u32[]', space=smem, size = 0x4, offset = 0x4, fixed_abs, tag = 'smem constant byte address 0x4 - core index']
  #allocation1 [shape = 'u32[144,128]{1,0:T(1,128)}', space=vmem, size = 0x12000, scoped, tag = 'internal scratch']
  %s0 = inlined_call_operand.vmem [shape: bf16[8,128], index: 0, kind: input, shape index: {}]
  %s1 = inlined_call_operand.vmem [shape: f32[8,1], index: 1, kind: input, shape index: {}]
  %s2 = inlined_call_operand.vmem [shape: bf16[128,128], index: 2, kind: input, shape index: {}]
  %s3 = inlined_call_operand.vmem [shape: f32[1,128], index: 3, kind: input, shape index: {}]
  %s4 = inlined_call_operand.vmem [shape: f32[8,128], index: 4, kind: output, shape index: {}]
  %s5 = sld [smem:[#allocation0]]
  $region26: #{patchcore_forward.7} parent=0
    _
  %s7 = ssub.s32 1, %s5
  %s8 = scalar_select 0, %s7, %s5
  // Predicated region
  $region2: #{patchcore_forward.7} parent=0 // pred_check
    _
  $region3: #{patchcore_forward.7} parent=0 // pred_check_branch
    %10 = sbr.rel (0) target = $region5
  $region4: #{patchcore_forward.7} parent=0 // pred_region
    _
  $region5: #{patchcore_forward.7} parent=0 // pred_fallthru
    _
  // Predicated region
  $region6: #{patchcore_forward.7} parent=0 // pred_check
    _
  $region7: #{patchcore_forward.7} parent=0 // pred_check_branch
    %12 = sbr.rel (0) target = $region9
  $region8: #{patchcore_forward.7} parent=0 // pred_region
    _
  $region9: #{patchcore_forward.7} parent=0 // pred_fallthru
    _
  // Predicated region
  $region10: #{patchcore_forward.7} parent=0 // pred_check
    _
  $region11: #{patchcore_forward.7} parent=0 // pred_check_branch
    %14 = sbr.rel (0) target = $region13
  $region12: #{patchcore_forward.7} parent=0 // pred_region
    _
  $region13: #{patchcore_forward.7} parent=0 // pred_fallthru
    _
  // Predicated region
  $region14: #{patchcore_forward.7} parent=0 // pred_check
    _
  $region15: #{patchcore_forward.7} parent=0 // pred_check_branch
    %16 = sbr.rel (0) target = $region17
  $region16: #{patchcore_forward.7} parent=0 // pred_region
    _
  $region17: #{patchcore_forward.7} parent=0 // pred_fallthru
    _
  %v18 = vld [vmem:[%s0] sm:$0xf]
  %v19 = vld [vmem:[%s2] sm:$0xf]
  %v20 = vld [vmem:[%s2 + $0x4] sm:$0xf]
  %v21 = vld [vmem:[%s2 + $0x8] sm:$0xf]
  %v22 = vld [vmem:[%s2 + $0xc] sm:$0xf]
  %v23 = vld [vmem:[%s2 + $0x10] sm:$0xf]
  %v24 = vld [vmem:[%s2 + $0x14] sm:$0xf]
  %v25 = vld [vmem:[%s2 + $0x18] sm:$0xf]
  %v26 = vld [vmem:[%s2 + $0x1c] sm:$0xf]
  %v27 = vld [vmem:[%s2 + $0x20] sm:$0xf]
  %v28 = vld [vmem:[%s2 + $0x24] sm:$0xf]
  %v29 = vld [vmem:[%s2 + $0x28] sm:$0xf]
  %v30 = vld [vmem:[%s2 + $0x2c] sm:$0xf]
  %v31 = vld [vmem:[%s2 + $0x30] sm:$0xf]
  %v32 = vld [vmem:[%s2 + $0x34] sm:$0xf]
  %v33 = vld [vmem:[%s2 + $0x38] sm:$0xf]
  %v34 = vld [vmem:[%s2 + $0x3c] sm:$0xf]
  %v51 = vunpack.c.l.b16 %v19
  %v52 = vunpack.c.l.b16 %v20
  %v53 = vunpack.c.l.b16 %v21
  %v54 = vunpack.c.l.b16 %v22
  %v55 = vunpack.c.l.b16 %v23
  %v56 = vunpack.c.l.b16 %v24
  %v57 = vunpack.c.l.b16 %v25
  %v58 = vunpack.c.l.b16 %v26
  %v59 = vunpack.c.l.b16 %v27
  %v60 = vunpack.c.l.b16 %v28
  %v61 = vunpack.c.l.b16 %v29
  %v62 = vunpack.c.l.b16 %v30
  %v63 = vunpack.c.l.b16 %v31
  %v64 = vunpack.c.l.b16 %v32
  %v65 = vunpack.c.l.b16 %v33
  %v66 = vunpack.c.l.b16 %v34
  %v67 = vpack.c.b16 %v52, %v51
  %v68 = vpack.c.b16 %v54, %v53
  %v69 = vpack.c.b16 %v56, %v55
  %v70 = vpack.c.b16 %v58, %v57
  %v71 = vpack.c.b16 %v60, %v59
  %v72 = vpack.c.b16 %v62, %v61
  %v73 = vpack.c.b16 %v64, %v63
  %v74 = vpack.c.b16 %v66, %v65
  %83 = vmatprep.subr.bf16.mxu0 0
  %84 = vmatpush1.bf16.xpose.msra.mxu0 %v67
  %85 = vmatprep.subr.bf16.mxu0 0
  %86 = vmatpush1.bf16.xpose.msra.mxu0 %v68
  %87 = vmatprep.subr.bf16.mxu0 0
  %88 = vmatpush1.bf16.xpose.msra.mxu0 %v69
  %89 = vmatprep.subr.bf16.mxu0 0
  %90 = vmatpush1.bf16.xpose.msra.mxu0 %v70
  %91 = vmatprep.subr.bf16.mxu0 0
  %92 = vmatpush1.bf16.xpose.msra.mxu0 %v71
  %93 = vmatprep.subr.bf16.mxu0 0
  %94 = vmatpush1.bf16.xpose.msra.mxu0 %v72
  %95 = vmatprep.subr.bf16.mxu0 0
  %96 = vmatpush1.bf16.xpose.msra.mxu0 %v73
  %97 = vmatprep.subr.bf16.mxu0 0
  %98 = vmatpush1.bf16.xpose.msra.mxu0 %v74
  %99 = vmatprep.subr.bf16.mxu0 0
  %100 = vmatpush1.bf16.xpose.msra.mxu0 0
  %101 = vmatprep.subr.bf16.mxu0 0
  %102 = vmatpush1.bf16.xpose.msra.mxu0 0
  %103 = vmatprep.subr.bf16.mxu0 0
  %104 = vmatpush1.bf16.xpose.msra.mxu0 0
  %105 = vmatprep.subr.bf16.mxu0 0
  %106 = vmatpush1.bf16.xpose.msra.mxu0 0
  %107 = vmatprep.subr.bf16.mxu0 0
  %108 = vmatpush1.bf16.xpose.msra.mxu0 0
  %109 = vmatprep.subr.bf16.mxu0 0
  %110 = vmatpush1.bf16.xpose.msra.mxu0 0
  %111 = vmatprep.subr.bf16.mxu0 0
  %112 = vmatpush1.bf16.xpose.msra.mxu0 0
  %113 = vmatprep.subr.bf16.mxu0 0
  %114 = vmatpush1.bf16.xpose.msra.mxu0 0
  %115 = vmatprep.mubr.bf16.mxu0 0
  %116 = vmatmul.mubr.bf16.gmra.mrb[0].mxu0 %v18
  %v117 = vpop.f32.mrb[0].mxu0
  %v118 = vadd.f32 0.0, %v117
  %v119 = vpop.f32.mrb[0].mxu0
  %v120 = vpop.f32.mrb[0].mxu0
  %v121 = vpop.f32.mrb[0].mxu0
  %122 = vdwg.mxu0
  %v123 = vld [vmem:[%s1] sm:$0xff]
  %v124 = vld [vmem:[%s3] sm:$0x1]
  %126 = vset.pattern.permute.xlu0 0
  %127 = vperm.xlu0 %126, %v123
  %v128 = vpop.permute.xlu0 %127
  %v131 = vlaneseq
  %v132 = vshrl.u32 %v131, 7
  %v133 = vsub.s32 0, %v132
  %v134 = vrot.slane %v124, %v133
  %v136 = vadd.f32 %v128, %v134
  %v137 = vmul.f32 %v118, 2.0
  %v138 = vsub.f32 %v136, %v137
  %v139 = vmax.f32 %v138, 0.0
  %140 = vst [vmem:[%s4] sm:$0xff] %v139
  // Predicated region
  $region18: #{patchcore_forward.7} parent=0 // pred_check
    _
  $region19: #{patchcore_forward.7} parent=0 // pred_check_branch
    %142 = sbr.rel (0) target = $region21
  $region20: #{patchcore_forward.7} parent=0 // pred_region
    _
  $region21: #{patchcore_forward.7} parent=0 // pred_fallthru
    _
  // Predicated region
  $region22: #{patchcore_forward.7} parent=0 // pred_check
    _
  $region23: #{patchcore_forward.7} parent=0 // pred_check_branch
    %144 = sbr.rel (0) target = $region25
  $region24: #{patchcore_forward.7} parent=0 // pred_region
    _
  $region25: #{patchcore_forward.7} parent=0 // pred_fallthru
    _

// kernel: mul.19
$region0: #{mul.19}
  #allocation2 [shape = 's32[1]{0}', space=sflag, size = 0x4, scoped, tag = 'scoped memory for mul.19']
  %s0 = inlined_call_operand.vmem [shape: f32[2], index: 0, kind: input, shape index: {}]
  %s1 = inlined_call_operand.vmem [shape: f32[2], index: 1, kind: input, shape index: {}]
  %s2 = inlined_call_operand.hbm [shape: f32[2], index: 2, kind: output, shape index: {}]
  $region1: #{mul.19} parent=0
    #allocation0 [shape = 'u8[512]{0}', space=vmem, size = 0x400, scoped, tag = 'operand span for operand 2']
    #allocation1 [shape = 's32[1]{0}', space=sflag, size = 0x4, scoped, tag = 'scoped memory for mul.19']
    %3 = vsyncpa [#allocation1], 0
    %v4 = vld [vmem:[%s0] sm:$0x1]
    %v5 = vld [vmem:[%s1] sm:$0x1]
    %6 = xla_tuple %v4, %v5
    %7 = xla_tuple %6
    %v8 = vmul.f32 %v4, %v5
    %9 = xla_tuple %v8
    %10 = vst [vmem:[#allocation0] sm:$0x1] %v8
    %s12 = ssub.s32 16, 16
    %13 = vsyncadd [#allocation1], %s12
    %s15 = sshll.u32 [#allocation0], 4
    %s16 = int_to_ptr.vmem [resolvable:$true] %s15
    %18 = dma.vmem_to_hbm [thread:$0]  %s16, 16, %s2, [#allocation1]
    %19 = dma.done [#allocation1], 16
    %20 = vsyncpa [#allocation1], 1

</llo_original>
